<compile_context>
chip_gen: v6e
topology: v6e:2x2x1
jax: 0.10.0
libtpu: 0.0.40
codegen_flags: <defaults>
</compile_context>

<pallas_src>
import functools

import jax
import jax.numpy as jnp
import numpy as np
from jax.experimental import pallas as pl
from jax.experimental.pallas import tpu as pltpu


def _round_up(x, m):
    return (x + m - 1) // m * m


def _pick_batch_tile(N, HW, HoWo, Cin_p, Cout_p):
    """Largest divisor B of N such that (a) the grid keeps >= 2 steps when
    N >= 2 (so v7x's two TensorCores both get work) and (b) the per-step
    working set (im2col slabs + activations + block-diag selector) stays well
    under the scoped VMEM budget."""
    best = 1
    for B in range(1, N + 1):
        if N % B:
            continue
        if N >= 2 and N // B < 2:
            continue
        slabs = 4 * B * HW * (9 * Cin_p + 9 * Cout_p + Cin_p + 3 * Cout_p)
        selector = 4 * (B * HW) * (B * HoWo)
        if slabs + selector > 8 * 1024 * 1024:
            continue
        best = max(best, B)
    return best


# ----------------------------------------------------------------------------
# Fused kernel: conv3x3+ReLU -> conv3x3+ReLU -> pool, B images per grid step.
# ----------------------------------------------------------------------------
def _conv_block_kernel(x_ref, mask_ref, w1_ref, b1_ref, w2_ref, b2_ref,
                       psel_ref, o_ref, *, B, H, W, ph, pw, pool_type,
                       mm_dtype):
    HW = H * W
    L = B * HW                       # lane width of the per-step working slab

    # Lane-stack the B images of this step: (Cin_p, B*HW).  Each piece is
    # 128-lane aligned, so the concat is just tile placement in VMEM.
    if B == 1:
        x = x_ref[0]
    else:
        x = jnp.concatenate([x_ref[b] for b in range(B)], axis=1)

    def shifted_taps(a):
        # a: (C, L) with C % 8 == 0.  Returns the (9*C, L) im2col slab: the 9
        # spatially shifted copies stacked on sublanes.  The per-image tiled
        # masks zero both the 'same'-padding halo reads and any cross-image
        # reads of the lane rotation.
        taps = []
        for t in range(9):
            dy, dx = t // 3 - 1, t % 3 - 1
            s = dy * W + dx
            if s == 0:
                taps.append(a)
            else:
                at = pltpu.roll(a, (-s) % L, axis=1)   # XLU lane rotation
                taps.append(at * mask_ref[t])          # VPU halo mask
        return jnp.concatenate(taps, axis=0)           # tile-aligned concat

    def conv3x3_relu(a, w_ref, b_ref):
        # ONE MXU matmul per conv: (Cout_p, 9*Cpad) @ (9*Cpad, B*HW).
        # Only the dot operands are (optionally) bf16; mask/bias/ReLU stay f32.
        slab = shifted_taps(a).astype(mm_dtype)
        y = jnp.dot(w_ref[...], slab, preferred_element_type=jnp.float32)
        return jnp.maximum(y + b_ref[...], 0.0)        # (Cout_p, L)

    y1 = conv3x3_relu(x, w1_ref, b1_ref)               # conv1 + ReLU
    y2 = conv3x3_relu(y1, w2_ref, b2_ref)              # conv2 + ReLU

    # ---- pooling epilogue: roll-based window reduce + ONE shared top-left
    # selector matmul (no dense averaging operator; 'avg+max' is one matmul
    # by linearity).  Only selected lanes (complete windows) survive, so the
    # roll wraparound never leaks across images.
    def window_reduce(v, op):
        r = v
        for i in range(ph):
            for j in range(pw):
                s = i * W + j
                if s:
                    r = op(r, pltpu.roll(v, (-s) % L, axis=1))
        return r

    inv_win = 1.0 / float(ph * pw)
    if pool_type == "avg":
        slab = window_reduce(y2, jnp.add) * inv_win
    elif pool_type == "max":
        slab = window_reduce(y2, jnp.maximum)
    else:                                              # 'avg+max'
        slab = (window_reduce(y2, jnp.add) * inv_win
                + window_reduce(y2, jnp.maximum))

    # Single lane-dense store of the whole (Cout_p, B*HoWo) output block.
    o_ref[0] = jnp.dot(slab, psel_ref[...],
                       preferred_element_type=jnp.float32).astype(o_ref.dtype)


# ----------------------------------------------------------------------------
# Host-side constant operands (built once from static shapes)
# ----------------------------------------------------------------------------
def _tap_masks(H, W, B):
    """(9, 1, B*H*W) masks, tiled per image: 1.0 where the shifted read stays
    inside its own image, 0.0 where 'same' padding supplies a zero (this also
    zeroes cross-image reads of the lane rotation)."""
    HW = H * W
    p = np.arange(HW)
    py, px = p // W, p % W
    masks = np.zeros((9, 1, HW), np.float32)
    for t in range(9):
        dy, dx = t // 3 - 1, t % 3 - 1
        ok = (py + dy >= 0) & (py + dy < H) & (px + dx >= 0) & (px + dx < W)
        masks[t, 0] = ok.astype(np.float32)
    return jnp.asarray(np.tile(masks, (1, 1, B)))


def _pool_selector(H, W, ph, pw, B):
    """(B*H*W, B*Ho*Wo) block-diagonal top-left window selector (floor-mode
    pooling, matching PyTorch).  Shared by avg and max pooling."""
    Ho, Wo = H // ph, W // pw
    HW, HoWo = H * W, Ho * Wo
    p = np.arange(HW)
    py, px = p // W, p % W
    q = np.arange(HoWo)
    qy, qx = q // Wo, q % Wo
    sel = ((py[:, None] == qy[None, :] * ph) &
           (px[:, None] == qx[None, :] * pw)).astype(np.float32)
    if B > 1:
        sel = np.kron(np.eye(B, dtype=np.float32), sel)
    return jnp.asarray(sel)


# ----------------------------------------------------------------------------
# ConvBlock forward (NCHW in / NCHW out, matching the PyTorch module)
# ----------------------------------------------------------------------------
@functools.partial(jax.jit,
                   static_argnames=("pool_size", "pool_type", "batch_tile",
                                    "use_bf16_matmul"))
def conv_block_forward(x_nchw, params, pool_size=(2, 2), pool_type="avg",
                       batch_tile=None, use_bf16_matmul=False):
    if pool_type not in ("avg", "max", "avg+max"):
        raise Exception("Incorrect argument!")
    w1, b1, w2, b2 = params               # w: (3,3,Cin,Cout) HWIO; b: (Cout,)
    N, Cin, H, W = x_nchw.shape
    Cout = w1.shape[-1]
    ph, pw = pool_size
    Ho, Wo = H // ph, W // pw
    HW, HoWo = H * W, Ho * Wo
    Cin_p, Cout_p = _round_up(Cin, 8), _round_up(Cout, 8)

    B = batch_tile if batch_tile is not None else _pick_batch_tile(
        N, HW, HoWo, Cin_p, Cout_p)
    assert N % B == 0, (N, B)
    G = N // B

    # NCHW -> (N, Cin_p, H*W): free reshape + tiny wrapper-side channel pad
    # (replaces the old in-kernel zero-fill / partial-store / reload scratch).
    x3 = x_nchw.reshape(N, Cin, HW)
    if Cin_p != Cin:
        x3 = jnp.pad(x3, ((0, 0), (0, Cin_p - Cin), (0, 0)))

    mm_dtype = jnp.bfloat16 if use_bf16_matmul else jnp.float32

    # Pre-flatten weights into single contiguous MXU tiles (Cout_p, 9*Cin_p),
    # tap-major / channel-minor, zero-padded channels (tiny weight-only op).
    def flatten_w(w, cin, cin_p):
        wt = jnp.transpose(w, (3, 0, 1, 2))                     # (Cout,3,3,cin)
        wt = jnp.pad(wt, ((0, Cout_p - Cout), (0, 0), (0, 0), (0, cin_p - cin)))
        return wt.reshape(Cout_p, 9 * cin_p).astype(mm_dtype)

    w1_2d = flatten_w(w1, Cin, Cin_p)
    w2_2d = flatten_w(w2, Cout, Cout_p)
    b1_2d = jnp.pad(b1, (0, Cout_p - Cout)).reshape(Cout_p, 1)
    b2_2d = jnp.pad(b2, (0, Cout_p - Cout)).reshape(Cout_p, 1)

    masks = _tap_masks(H, W, B)                 # (9, 1, B*HW)
    p_sel = _pool_selector(H, W, ph, pw, B)     # (B*HW, B*HoWo)

    kernel = functools.partial(_conv_block_kernel, B=B, H=H, W=W, ph=ph, pw=pw,
                               pool_type=pool_type, mm_dtype=mm_dtype)
    out = pl.pallas_call(
        kernel,
        out_shape=jax.ShapeDtypeStruct((G, Cout_p, B * HoWo), jnp.float32),
        grid=(G,),
        in_specs=[
            pl.BlockSpec((B, Cin_p, HW), lambda g: (g, 0, 0)),      # B images
            pl.BlockSpec((9, 1, B * HW), lambda g: (0, 0, 0)),      # halo masks
            pl.BlockSpec((Cout_p, 9 * Cin_p), lambda g: (0, 0)),    # w1 (im2col)
            pl.BlockSpec((Cout_p, 1), lambda g: (0, 0)),            # b1
            pl.BlockSpec((Cout_p, 9 * Cout_p), lambda g: (0, 0)),   # w2 (im2col)
            pl.BlockSpec((Cout_p, 1), lambda g: (0, 0)),            # b2
            pl.BlockSpec((B * HW, B * HoWo), lambda g: (0, 0)),     # pool selector
        ],
        out_specs=pl.BlockSpec((1, Cout_p, B * HoWo), lambda g: (g, 0, 0)),
        compiler_params=pltpu.CompilerParams(
            dimension_semantics=("parallel",),
            vmem_limit_bytes=32 * 1024 * 1024),
    )(x3, masks, w1_2d, b1_2d, w2_2d, b2_2d, p_sel)

    # Undo the per-step lane stacking and drop padded channel rows with tiny
    # XLA ops on the already-pooled (4x smaller) output.
    out = out.reshape(G, Cout_p, B, HoWo).transpose(0, 2, 1, 3)
    out = out.reshape(N, Cout_p, Ho, Wo)[:, :Cout]
    return out


# ----------------------------------------------------------------------------
# Pure-JAX reference (correctness check only)
# ----------------------------------------------------------------------------
def reference_forward(x_nchw, params, pool_size=(2, 2), pool_type="avg"):
    w1, b1, w2, b2 = params
    dn = ("NCHW", "HWIO", "NCHW")
    x = jax.lax.conv_general_dilated(x_nchw, w1, (1, 1), "SAME",
                                     dimension_numbers=dn)
    x = jnp.maximum(x + b1[None, :, None, None], 0.0)
    x = jax.lax.conv_general_dilated(x, w2, (1, 1), "SAME",
                                     dimension_numbers=dn)
    x = jnp.maximum(x + b2[None, :, None, None], 0.0)
    N, C, H, W = x.shape
    ph, pw = pool_size
    Ho, Wo = H // ph, W // pw
    xw = x[:, :, :Ho * ph, :Wo * pw].reshape(N, C, Ho, ph, Wo, pw)
    if pool_type == "avg":
        return xw.mean(axis=(3, 5))
    if pool_type == "max":
        return xw.max(axis=(3, 5))
    return xw.mean(axis=(3, 5)) + xw.max(axis=(3, 5))


# ----------------------------------------------------------------------------
# Deterministic parameter init (xavier_uniform weights, zero bias)
# ----------------------------------------------------------------------------
def init_conv_block_params(key, in_channels, out_channels):
    k1, k2 = jax.random.split(key)

    def xavier(k, cin, cout):
        fan_in, fan_out = cin * 9, cout * 9
        bound = float(np.sqrt(6.0 / (fan_in + fan_out)))
        return jax.random.uniform(k, (3, 3, cin, cout), jnp.float32,
                                  -bound, bound)

    w1 = xavier(k1, in_channels, out_channels)
    b1 = jnp.zeros((out_channels,), jnp.float32)
    w2 = xavier(k2, out_channels, out_channels)
    b2 = jnp.zeros((out_channels,), jnp.float32)
    return (w1, b1, w2, b2)


if __name__ == "__main__":
    key = jax.random.PRNGKey(0)
    kp, kx = jax.random.split(key)

    N, Cin, H, W = 8, 4, 16, 16          # small KWS-style shapes; B=4, grid=2
    Cout = 8
    params = init_conv_block_params(kp, Cin, Cout)
    x = jax.random.normal(kx, (N, Cin, H, W), jnp.float32)   # NCHW (PyTorch)

    # f32 path (matches the PyTorch module numerics)
    for pool_type in ("avg", "max", "avg+max"):
        out = conv_block_forward(x, params, pool_size=(2, 2),
                                 pool_type=pool_type)
        out = jax.block_until_ready(out)
        assert out.shape == (N, Cout, H // 2, W // 2), out.shape
        ref = reference_forward(x, params, (2, 2), pool_type)
        np.testing.assert_allclose(np.asarray(out), np.asarray(ref),
                                   rtol=1e-4, atol=1e-4)

    # bf16-MXU-operand path (v6e/v7x option): looser tolerance
    out_bf16 = conv_block_forward(x, params, pool_size=(2, 2),
                                  pool_type="avg", use_bf16_matmul=True)
    out_bf16 = jax.block_until_ready(out_bf16)
    ref = reference_forward(x, params, (2, 2), "avg")
    np.testing.assert_allclose(np.asarray(out_bf16), np.asarray(ref),
                               rtol=5e-2, atol=5e-2)

    print("KERNEL_OK")
</pallas_src>

<mosaic_0001>
module attributes {stable_mosaic.version = 11 : i64} {
  func.func @_conv_block_kernel(%arg0: i32, %arg1: memref<4x8x256xf32, #tpu.memory_space<vmem>>, %arg2: memref<9x1x1024xf32, #tpu.memory_space<vmem>>, %arg3: memref<8x72xf32, #tpu.memory_space<vmem>>, %arg4: memref<8x1xf32, #tpu.memory_space<vmem>>, %arg5: memref<8x72xf32, #tpu.memory_space<vmem>>, %arg6: memref<8x1xf32, #tpu.memory_space<vmem>>, %arg7: memref<1024x256xf32, #tpu.memory_space<vmem>>, %arg8: memref<1x8x256xf32, #tpu.memory_space<vmem>>) attributes {dimension_semantics = [#tpu.dimension_semantics<parallel>], iteration_bounds = array<i64: 2>, scalar_prefetch = 0 : i64, scratch_operands = 0 : i64, tpu.core_type = #tpu.core_type<tc>, window_params = [{transform_indices = @transform_0, window_bounds = array<i64: 4, 8, 256>}, {pipeline_mode = #tpu.pipeline_mode<synchronous>, transform_indices = @transform_1, window_bounds = array<i64: 9, 1, 1024>}, {pipeline_mode = #tpu.pipeline_mode<synchronous>, transform_indices = @transform_2, window_bounds = array<i64: 8, 72>}, {pipeline_mode = #tpu.pipeline_mode<synchronous>, transform_indices = @transform_3, window_bounds = array<i64: 8, 1>}, {pipeline_mode = #tpu.pipeline_mode<synchronous>, transform_indices = @transform_4, window_bounds = array<i64: 8, 72>}, {pipeline_mode = #tpu.pipeline_mode<synchronous>, transform_indices = @transform_5, window_bounds = array<i64: 8, 1>}, {pipeline_mode = #tpu.pipeline_mode<synchronous>, transform_indices = @transform_6, window_bounds = array<i64: 1024, 256>}, {transform_indices = @transform_7, window_bounds = array<i64: 1, 8, 256>}]} {
    %c0 = arith.constant 0 : index
    %c0_0 = arith.constant 0 : index
    %c0_1 = arith.constant 0 : index
    %0 = vector.load %arg1[%c0, %c0_0, %c0_1] : memref<4x8x256xf32, #tpu.memory_space<vmem>>, vector<1x8x256xf32>
    %1 = vector.shape_cast %0 : vector<1x8x256xf32> to vector<8x256xf32>
    %c1 = arith.constant 1 : index
    %c0_2 = arith.constant 0 : index
    %c0_3 = arith.constant 0 : index
    %2 = vector.load %arg1[%c1, %c0_2, %c0_3] : memref<4x8x256xf32, #tpu.memory_space<vmem>>, vector<1x8x256xf32>
    %3 = vector.shape_cast %2 : vector<1x8x256xf32> to vector<8x256xf32>
    %c2 = arith.constant 2 : index
    %c0_4 = arith.constant 0 : index
    %c0_5 = arith.constant 0 : index
    %4 = vector.load %arg1[%c2, %c0_4, %c0_5] : memref<4x8x256xf32, #tpu.memory_space<vmem>>, vector<1x8x256xf32>
    %5 = vector.shape_cast %4 : vector<1x8x256xf32> to vector<8x256xf32>
    %c3 = arith.constant 3 : index
    %c0_6 = arith.constant 0 : index
    %c0_7 = arith.constant 0 : index
    %6 = vector.load %arg1[%c3, %c0_6, %c0_7] : memref<4x8x256xf32, #tpu.memory_space<vmem>>, vector<1x8x256xf32>
    %7 = vector.shape_cast %6 : vector<1x8x256xf32> to vector<8x256xf32>
    %8 = tpu.concatenate %1, %3, %5, %7 in 1 : vector<8x256xf32>, vector<8x256xf32>, vector<8x256xf32>, vector<8x256xf32> -> vector<8x1024xf32>
    %c17_i32 = arith.constant 17 : i32
    %9 = tpu.dynamic_rotate %8 by %c17_i32 dim 1 : vector<8x1024xf32>, i32 -> vector<8x1024xf32>
    %c0_8 = arith.constant 0 : index
    %c0_9 = arith.constant 0 : index
    %c0_10 = arith.constant 0 : index
    %10 = vector.load %arg2[%c0_8, %c0_9, %c0_10] : memref<9x1x1024xf32, #tpu.memory_space<vmem>>, vector<1x1x1024xf32>
    %11 = vector.shape_cast %10 : vector<1x1x1024xf32> to vector<1x1024xf32>
    %12 = vector.broadcast %11 : vector<1x1024xf32> to vector<8x1024xf32>
    %13 = arith.mulf %9, %12 : vector<8x1024xf32>
    %c16_i32 = arith.constant 16 : i32
    %14 = tpu.dynamic_rotate %8 by %c16_i32 dim 1 : vector<8x1024xf32>, i32 -> vector<8x1024xf32>
    %c1_11 = arith.constant 1 : index
    %c0_12 = arith.constant 0 : index
    %c0_13 = arith.constant 0 : index
    %15 = vector.load %arg2[%c1_11, %c0_12, %c0_13] : memref<9x1x1024xf32, #tpu.memory_space<vmem>>, vector<1x1x1024xf32>
    %16 = vector.shape_cast %15 : vector<1x1x1024xf32> to vector<1x1024xf32>
    %17 = vector.broadcast %16 : vector<1x1024xf32> to vector<8x1024xf32>
    %18 = arith.mulf %14, %17 : vector<8x1024xf32>
    %c15_i32 = arith.constant 15 : i32
    %19 = tpu.dynamic_rotate %8 by %c15_i32 dim 1 : vector<8x1024xf32>, i32 -> vector<8x1024xf32>
    %c2_14 = arith.constant 2 : index
    %c0_15 = arith.constant 0 : index
    %c0_16 = arith.constant 0 : index
    %20 = vector.load %arg2[%c2_14, %c0_15, %c0_16] : memref<9x1x1024xf32, #tpu.memory_space<vmem>>, vector<1x1x1024xf32>
    %21 = vector.shape_cast %20 : vector<1x1x1024xf32> to vector<1x1024xf32>
    %22 = vector.broadcast %21 : vector<1x1024xf32> to vector<8x1024xf32>
    %23 = arith.mulf %19, %22 : vector<8x1024xf32>
    %c1_i32 = arith.constant 1 : i32
    %24 = tpu.dynamic_rotate %8 by %c1_i32 dim 1 : vector<8x1024xf32>, i32 -> vector<8x1024xf32>
    %c3_17 = arith.constant 3 : index
    %c0_18 = arith.constant 0 : index
    %c0_19 = arith.constant 0 : index
    %25 = vector.load %arg2[%c3_17, %c0_18, %c0_19] : memref<9x1x1024xf32, #tpu.memory_space<vmem>>, vector<1x1x1024xf32>
    %26 = vector.shape_cast %25 : vector<1x1x1024xf32> to vector<1x1024xf32>
    %27 = vector.broadcast %26 : vector<1x1024xf32> to vector<8x1024xf32>
    %28 = arith.mulf %24, %27 : vector<8x1024xf32>
    %c1023_i32 = arith.constant 1023 : i32
    %29 = tpu.dynamic_rotate %8 by %c1023_i32 dim 1 : vector<8x1024xf32>, i32 -> vector<8x1024xf32>
    %c5 = arith.constant 5 : index
    %c0_20 = arith.constant 0 : index
    %c0_21 = arith.constant 0 : index
    %30 = vector.load %arg2[%c5, %c0_20, %c0_21] : memref<9x1x1024xf32, #tpu.memory_space<vmem>>, vector<1x1x1024xf32>
    %31 = vector.shape_cast %30 : vector<1x1x1024xf32> to vector<1x1024xf32>
    %32 = vector.broadcast %31 : vector<1x1024xf32> to vector<8x1024xf32>
    %33 = arith.mulf %29, %32 : vector<8x1024xf32>
    %c1009_i32 = arith.constant 1009 : i32
    %34 = tpu.dynamic_rotate %8 by %c1009_i32 dim 1 : vector<8x1024xf32>, i32 -> vector<8x1024xf32>
    %c6 = arith.constant 6 : index
    %c0_22 = arith.constant 0 : index
    %c0_23 = arith.constant 0 : index
    %35 = vector.load %arg2[%c6, %c0_22, %c0_23] : memref<9x1x1024xf32, #tpu.memory_space<vmem>>, vector<1x1x1024xf32>
    %36 = vector.shape_cast %35 : vector<1x1x1024xf32> to vector<1x1024xf32>
    %37 = vector.broadcast %36 : vector<1x1024xf32> to vector<8x1024xf32>
    %38 = arith.mulf %34, %37 : vector<8x1024xf32>
    %c1008_i32 = arith.constant 1008 : i32
    %39 = tpu.dynamic_rotate %8 by %c1008_i32 dim 1 : vector<8x1024xf32>, i32 -> vector<8x1024xf32>
    %c7 = arith.constant 7 : index
    %c0_24 = arith.constant 0 : index
    %c0_25 = arith.constant 0 : index
    %40 = vector.load %arg2[%c7, %c0_24, %c0_25] : memref<9x1x1024xf32, #tpu.memory_space<vmem>>, vector<1x1x1024xf32>
    %41 = vector.shape_cast %40 : vector<1x1x1024xf32> to vector<1x1024xf32>
    %42 = vector.broadcast %41 : vector<1x1024xf32> to vector<8x1024xf32>
    %43 = arith.mulf %39, %42 : vector<8x1024xf32>
    %c1007_i32 = arith.constant 1007 : i32
    %44 = tpu.dynamic_rotate %8 by %c1007_i32 dim 1 : vector<8x1024xf32>, i32 -> vector<8x1024xf32>
    %c8 = arith.constant 8 : index
    %c0_26 = arith.constant 0 : index
    %c0_27 = arith.constant 0 : index
    %45 = vector.load %arg2[%c8, %c0_26, %c0_27] : memref<9x1x1024xf32, #tpu.memory_space<vmem>>, vector<1x1x1024xf32>
    %46 = vector.shape_cast %45 : vector<1x1x1024xf32> to vector<1x1024xf32>
    %47 = vector.broadcast %46 : vector<1x1024xf32> to vector<8x1024xf32>
    %48 = arith.mulf %44, %47 : vector<8x1024xf32>
    %49 = tpu.concatenate %13, %18, %23, %28, %8, %33, %38, %43, %48 in 0 : vector<8x1024xf32>, vector<8x1024xf32>, vector<8x1024xf32>, vector<8x1024xf32>, vector<8x1024xf32>, vector<8x1024xf32>, vector<8x1024xf32>, vector<8x1024xf32>, vector<8x1024xf32> -> vector<72x1024xf32>
    %c0_28 = arith.constant 0 : index
    %c0_29 = arith.constant 0 : index
    %50 = vector.load %arg3[%c0_28, %c0_29] : memref<8x72xf32, #tpu.memory_space<vmem>>, vector<8x72xf32>
    %cst = arith.constant dense<0.000000e+00> : vector<8x1024xf32>
    %51 = tpu.matmul %50, %49, %cst {dimension_numbers = #tpu.dot_dimension_numbers<[1], [0], [0], [1], [0, 0, 1, 1], [], []>} : vector<8x72xf32>, vector<72x1024xf32>, vector<8x1024xf32> -> vector<8x1024xf32>
    %c0_30 = arith.constant 0 : index
    %c0_31 = arith.constant 0 : index
    %52 = vector.load %arg4[%c0_30, %c0_31] : memref<8x1xf32, #tpu.memory_space<vmem>>, vector<8x1xf32>
    %53 = vector.broadcast %52 : vector<8x1xf32> to vector<8x1024xf32>
    %54 = arith.addf %51, %53 : vector<8x1024xf32>
    %cst_32 = arith.constant 0.000000e+00 : f32
    %55 = vector.broadcast %cst_32 : f32 to vector<8x1024xf32>
    %56 = arith.maximumf %54, %55 : vector<8x1024xf32>
    %c17_i32_33 = arith.constant 17 : i32
    %57 = tpu.dynamic_rotate %56 by %c17_i32_33 dim 1 : vector<8x1024xf32>, i32 -> vector<8x1024xf32>
    %c0_34 = arith.constant 0 : index
    %c0_35 = arith.constant 0 : index
    %c0_36 = arith.constant 0 : index
    %58 = vector.load %arg2[%c0_34, %c0_35, %c0_36] : memref<9x1x1024xf32, #tpu.memory_space<vmem>>, vector<1x1x1024xf32>
    %59 = vector.shape_cast %58 : vector<1x1x1024xf32> to vector<1x1024xf32>
    %60 = vector.broadcast %59 : vector<1x1024xf32> to vector<8x1024xf32>
    %61 = arith.mulf %57, %60 : vector<8x1024xf32>
    %c16_i32_37 = arith.constant 16 : i32
    %62 = tpu.dynamic_rotate %56 by %c16_i32_37 dim 1 : vector<8x1024xf32>, i32 -> vector<8x1024xf32>
    %c1_38 = arith.constant 1 : index
    %c0_39 = arith.constant 0 : index
    %c0_40 = arith.constant 0 : index
    %63 = vector.load %arg2[%c1_38, %c0_39, %c0_40] : memref<9x1x1024xf32, #tpu.memory_space<vmem>>, vector<1x1x1024xf32>
    %64 = vector.shape_cast %63 : vector<1x1x1024xf32> to vector<1x1024xf32>
    %65 = vector.broadcast %64 : vector<1x1024xf32> to vector<8x1024xf32>
    %66 = arith.mulf %62, %65 : vector<8x1024xf32>
    %c15_i32_41 = arith.constant 15 : i32
    %67 = tpu.dynamic_rotate %56 by %c15_i32_41 dim 1 : vector<8x1024xf32>, i32 -> vector<8x1024xf32>
    %c2_42 = arith.constant 2 : index
    %c0_43 = arith.constant 0 : index
    %c0_44 = arith.constant 0 : index
    %68 = vector.load %arg2[%c2_42, %c0_43, %c0_44] : memref<9x1x1024xf32, #tpu.memory_space<vmem>>, vector<1x1x1024xf32>
    %69 = vector.shape_cast %68 : vector<1x1x1024xf32> to vector<1x1024xf32>
    %70 = vector.broadcast %69 : vector<1x1024xf32> to vector<8x1024xf32>
    %71 = arith.mulf %67, %70 : vector<8x1024xf32>
    %c1_i32_45 = arith.constant 1 : i32
    %72 = tpu.dynamic_rotate %56 by %c1_i32_45 dim 1 : vector<8x1024xf32>, i32 -> vector<8x1024xf32>
    %c3_46 = arith.constant 3 : index
    %c0_47 = arith.constant 0 : index
    %c0_48 = arith.constant 0 : index
    %73 = vector.load %arg2[%c3_46, %c0_47, %c0_48] : memref<9x1x1024xf32, #tpu.memory_space<vmem>>, vector<1x1x1024xf32>
    %74 = vector.shape_cast %73 : vector<1x1x1024xf32> to vector<1x1024xf32>
    %75 = vector.broadcast %74 : vector<1x1024xf32> to vector<8x1024xf32>
    %76 = arith.mulf %72, %75 : vector<8x1024xf32>
    %c1023_i32_49 = arith.constant 1023 : i32
    %77 = tpu.dynamic_rotate %56 by %c1023_i32_49 dim 1 : vector<8x1024xf32>, i32 -> vector<8x1024xf32>
    %c5_50 = arith.constant 5 : index
    %c0_51 = arith.constant 0 : index
    %c0_52 = arith.constant 0 : index
    %78 = vector.load %arg2[%c5_50, %c0_51, %c0_52] : memref<9x1x1024xf32, #tpu.memory_space<vmem>>, vector<1x1x1024xf32>
    %79 = vector.shape_cast %78 : vector<1x1x1024xf32> to vector<1x1024xf32>
    %80 = vector.broadcast %79 : vector<1x1024xf32> to vector<8x1024xf32>
    %81 = arith.mulf %77, %80 : vector<8x1024xf32>
    %c1009_i32_53 = arith.constant 1009 : i32
    %82 = tpu.dynamic_rotate %56 by %c1009_i32_53 dim 1 : vector<8x1024xf32>, i32 -> vector<8x1024xf32>
    %c6_54 = arith.constant 6 : index
    %c0_55 = arith.constant 0 : index
    %c0_56 = arith.constant 0 : index
    %83 = vector.load %arg2[%c6_54, %c0_55, %c0_56] : memref<9x1x1024xf32, #tpu.memory_space<vmem>>, vector<1x1x1024xf32>
    %84 = vector.shape_cast %83 : vector<1x1x1024xf32> to vector<1x1024xf32>
    %85 = vector.broadcast %84 : vector<1x1024xf32> to vector<8x1024xf32>
    %86 = arith.mulf %82, %85 : vector<8x1024xf32>
    %c1008_i32_57 = arith.constant 1008 : i32
    %87 = tpu.dynamic_rotate %56 by %c1008_i32_57 dim 1 : vector<8x1024xf32>, i32 -> vector<8x1024xf32>
    %c7_58 = arith.constant 7 : index
    %c0_59 = arith.constant 0 : index
    %c0_60 = arith.constant 0 : index
    %88 = vector.load %arg2[%c7_58, %c0_59, %c0_60] : memref<9x1x1024xf32, #tpu.memory_space<vmem>>, vector<1x1x1024xf32>
    %89 = vector.shape_cast %88 : vector<1x1x1024xf32> to vector<1x1024xf32>
    %90 = vector.broadcast %89 : vector<1x1024xf32> to vector<8x1024xf32>
    %91 = arith.mulf %87, %90 : vector<8x1024xf32>
    %c1007_i32_61 = arith.constant 1007 : i32
    %92 = tpu.dynamic_rotate %56 by %c1007_i32_61 dim 1 : vector<8x1024xf32>, i32 -> vector<8x1024xf32>
    %c8_62 = arith.constant 8 : index
    %c0_63 = arith.constant 0 : index
    %c0_64 = arith.constant 0 : index
    %93 = vector.load %arg2[%c8_62, %c0_63, %c0_64] : memref<9x1x1024xf32, #tpu.memory_space<vmem>>, vector<1x1x1024xf32>
    %94 = vector.shape_cast %93 : vector<1x1x1024xf32> to vector<1x1024xf32>
    %95 = vector.broadcast %94 : vector<1x1024xf32> to vector<8x1024xf32>
    %96 = arith.mulf %92, %95 : vector<8x1024xf32>
    %97 = tpu.concatenate %61, %66, %71, %76, %56, %81, %86, %91, %96 in 0 : vector<8x1024xf32>, vector<8x1024xf32>, vector<8x1024xf32>, vector<8x1024xf32>, vector<8x1024xf32>, vector<8x1024xf32>, vector<8x1024xf32>, vector<8x1024xf32>, vector<8x1024xf32> -> vector<72x1024xf32>
    %c0_65 = arith.constant 0 : index
    %c0_66 = arith.constant 0 : index
    %98 = vector.load %arg5[%c0_65, %c0_66] : memref<8x72xf32, #tpu.memory_space<vmem>>, vector<8x72xf32>
    %cst_67 = arith.constant dense<0.000000e+00> : vector<8x1024xf32>
    %99 = tpu.matmul %98, %97, %cst_67 {dimension_numbers = #tpu.dot_dimension_numbers<[1], [0], [0], [1], [0, 0, 1, 1], [], []>} : vector<8x72xf32>, vector<72x1024xf32>, vector<8x1024xf32> -> vector<8x1024xf32>
    %c0_68 = arith.constant 0 : index
    %c0_69 = arith.constant 0 : index
    %100 = vector.load %arg6[%c0_68, %c0_69] : memref<8x1xf32, #tpu.memory_space<vmem>>, vector<8x1xf32>
    %101 = vector.broadcast %100 : vector<8x1xf32> to vector<8x1024xf32>
    %102 = arith.addf %99, %101 : vector<8x1024xf32>
    %cst_70 = arith.constant 0.000000e+00 : f32
    %103 = vector.broadcast %cst_70 : f32 to vector<8x1024xf32>
    %104 = arith.maximumf %102, %103 : vector<8x1024xf32>
    %c1023_i32_71 = arith.constant 1023 : i32
    %105 = tpu.dynamic_rotate %104 by %c1023_i32_71 dim 1 : vector<8x1024xf32>, i32 -> vector<8x1024xf32>
    %106 = arith.addf %104, %105 : vector<8x1024xf32>
    %c1008_i32_72 = arith.constant 1008 : i32
    %107 = tpu.dynamic_rotate %104 by %c1008_i32_72 dim 1 : vector<8x1024xf32>, i32 -> vector<8x1024xf32>
    %108 = arith.addf %106, %107 : vector<8x1024xf32>
    %c1007_i32_73 = arith.constant 1007 : i32
    %109 = tpu.dynamic_rotate %104 by %c1007_i32_73 dim 1 : vector<8x1024xf32>, i32 -> vector<8x1024xf32>
    %110 = arith.addf %108, %109 : vector<8x1024xf32>
    %cst_74 = arith.constant 2.500000e-01 : f32
    %111 = vector.broadcast %cst_74 : f32 to vector<8x1024xf32>
    %112 = arith.mulf %110, %111 : vector<8x1024xf32>
    %c0_75 = arith.constant 0 : index
    %c0_76 = arith.constant 0 : index
    %113 = vector.load %arg7[%c0_75, %c0_76] : memref<1024x256xf32, #tpu.memory_space<vmem>>, vector<1024x256xf32>
    %cst_77 = arith.constant dense<0.000000e+00> : vector<8x256xf32>
    %114 = tpu.matmul %112, %113, %cst_77 {dimension_numbers = #tpu.dot_dimension_numbers<[1], [0], [0], [1], [0, 0, 1, 1], [], []>} : vector<8x1024xf32>, vector<1024x256xf32>, vector<8x256xf32> -> vector<8x256xf32>
    %c0_78 = arith.constant 0 : index
    %c0_79 = arith.constant 0 : index
    %c0_80 = arith.constant 0 : index
    %115 = vector.load %arg8[%c0_78, %c0_79, %c0_80] : memref<1x8x256xf32, #tpu.memory_space<vmem>>, vector<1x8x256xf32>
    %116 = vector.shape_cast %115 : vector<1x8x256xf32> to vector<8x256xf32>
    %117 = vector.shape_cast %114 : vector<8x256xf32> to vector<1x8x256xf32>
    tpu.vector_store %arg8[%c0_78, %c0_79, %c0_80], %117 {strides = array<i32>} : memref<1x8x256xf32, #tpu.memory_space<vmem>>, vector<1x8x256xf32>,
    return
  }
  func.func @transform_0(%arg0: i32) -> (i32, i32, i32) {
    %c0_i32 = arith.constant 0 : i32
    %c0_i32_0 = arith.constant 0 : i32
    %c0_i32_1 = arith.constant 0 : i32
    return %arg0, %c0_i32, %c0_i32_0 : i32, i32, i32
  }
  func.func @transform_1(%arg0: i32) -> (i32, i32, i32) {
    %c0_i32 = arith.constant 0 : i32
    %c0_i32_0 = arith.constant 0 : i32
    %c0_i32_1 = arith.constant 0 : i32
    %c0_i32_2 = arith.constant 0 : i32
    return %c0_i32, %c0_i32_0, %c0_i32_1 : i32, i32, i32
  }
  func.func @transform_2(%arg0: i32) -> (i32, i32) {
    %c0_i32 = arith.constant 0 : i32
    %c0_i32_0 = arith.constant 0 : i32
    %c0_i32_1 = arith.constant 0 : i32
    return %c0_i32, %c0_i32_0 : i32, i32
  }
  func.func @transform_3(%arg0: i32) -> (i32, i32) {
    %c0_i32 = arith.constant 0 : i32
    %c0_i32_0 = arith.constant 0 : i32
    %c0_i32_1 = arith.constant 0 : i32
    return %c0_i32, %c0_i32_0 : i32, i32
  }
  func.func @transform_4(%arg0: i32) -> (i32, i32) {
    %c0_i32 = arith.constant 0 : i32
    %c0_i32_0 = arith.constant 0 : i32
    %c0_i32_1 = arith.constant 0 : i32
    return %c0_i32, %c0_i32_0 : i32, i32
  }
  func.func @transform_5(%arg0: i32) -> (i32, i32) {
    %c0_i32 = arith.constant 0 : i32
    %c0_i32_0 = arith.constant 0 : i32
    %c0_i32_1 = arith.constant 0 : i32
    return %c0_i32, %c0_i32_0 : i32, i32
  }
  func.func @transform_6(%arg0: i32) -> (i32, i32) {
    %c0_i32 = arith.constant 0 : i32
    %c0_i32_0 = arith.constant 0 : i32
    %c0_i32_1 = arith.constant 0 : i32
    return %c0_i32, %c0_i32_0 : i32, i32
  }
  func.func @transform_7(%arg0: i32) -> (i32, i32, i32) {
    %c0_i32 = arith.constant 0 : i32
    %c0_i32_0 = arith.constant 0 : i32
    %c0_i32_1 = arith.constant 0 : i32
    return %arg0, %c0_i32, %c0_i32_0 : i32, i32, i32
  }
}

</mosaic_0001>

<llo_original>
// kernel: conv_block_forward.1
$region0: #{conv_block_forward.1}
  #allocation0 [shape = 'u32[]', space=smem, size = 0x4, offset = 0x4, fixed_abs, tag = 'smem constant byte address 0x4 - core index']
  #allocation1 [shape = 'u32[144,128]{1,0:T(1,128)}', space=vmem, size = 0x12000, scoped, tag = 'internal scratch']
  %s0 = inlined_call_operand.vmem [shape: f32[8,8,256], index: 0, kind: input, shape index: {}]
  %s1 = inlined_call_operand.vmem [shape: f32[9,1,1024], index: 1, kind: input, shape index: {}]
  %s2 = inlined_call_operand.vmem [shape: f32[8,72], index: 2, kind: input, shape index: {}]
  %s3 = inlined_call_operand.vmem [shape: f32[8,1], index: 3, kind: input, shape index: {}]
  %s4 = inlined_call_operand.vmem [shape: f32[8,72], index: 4, kind: input, shape index: {}]
  %s5 = inlined_call_operand.vmem [shape: f32[8,1], index: 5, kind: input, shape index: {}]
  %s6 = inlined_call_operand.hbm [shape: f32[1024,256], index: 6, kind: input, shape index: {}]
  %s7 = inlined_call_operand.vmem [shape: f32[2,8,256], index: 7, kind: output, shape index: {}]
  %s8 = sld [smem:[#allocation0]]
  $region65: #{conv_block_forward.1} parent=0
    _
  %s10 = ssub.s32 1, %s8
  %s11 = scalar_select 0, %s10, %s8
  $region1: #{conv_block_forward.1} parent=0
    #allocation2 [shape = 'u8[1048576]{0}', space=vmem, size = 0x100000, scoped, tag = 'input window, operand 6, single buffered']
    #allocation3 [shape = 's32[2]{0}', space=sflag, size = 0x8, scoped, tag = 'scoped memory for conv_block_forward.1']
    %12 = vsyncpa [#allocation3], 0
    loop: start=0, step=1, limit=4
    $region2: #{conv_block_forward.1} parent=1 // loop_pre_header
      _
    $region3: #{conv_block_forward.1} parent=1 // loop_header
      %s14 = sphi 0, %s18
      %p15 = scmp.ge.s32.totalorder %s14, 4
      %s24 = sphi 0, %s26
      %s27 = sphi 0, %s24
      %s28 = sphi 0, %s27
      %s44 = sphi 0, %s28
      %s48 = sphi 0, %s48
      %s50 = sphi 0, %s48
      %s51 = sphi 0, %s50
      %s65 = sphi 0, %s51
      %s69 = sphi 0, %s69
      %s71 = sphi 0, %s69
      %s72 = sphi 0, %s71
      %s86 = sphi 0, %s72
      %s90 = sphi 0, %s90
      %s92 = sphi 0, %s90
      %s93 = sphi 0, %s92
      %s107 = sphi 0, %s93
      %s111 = sphi 0, %s111
      %s113 = sphi 0, %s111
      %s114 = sphi 0, %s113
      %s128 = sphi 0, %s114
      %s132 = sphi 0, %s132
      %s134 = sphi 0, %s132
      %s135 = sphi 0, %s134
      %s149 = sphi 0, %s135
      %s153 = sphi 0, %s153
      %s155 = sphi 0, %s153
      %s156 = sphi 0, %s155
      %s170 = sphi 0, %s156
      %s176 = sphi 0, %s178
      %s179 = sphi 0, %s176
      %s180 = sphi 0, %s179
      %s196 = sphi 0, %s180
    $region4: #{conv_block_forward.1} parent=1 // loop_header_branch
      %17 = sbr.rel (%p15) target = $region8
    $region5: #{conv_block_forward.1} parent=1 // loop_body
      %s19 = ssub.s32 %s14, 1
      %s20 = ssub.s32 %s14, 2
      %s21 = sadd.s32 %s14, 1
      %s22 = ssub.s32 %s14, %s21
      %p23 = scmp.eq.s32.totalorder %s22, 0
      %s25 = sadd.s32 %s24, 1
      %s26 = scalar_select %p23, %s24, %s25
      %p29 = pneg %p23
      %p30 = scmp.eq.s32.totalorder %s14, 1
      %p31 = por %p29, %p30
      %p32 = scmp.ne.s32.totalorder %s24, %s27
      %p33 = scmp.eq.s32.totalorder %s14, 0
      %p34 = por %p32, %p33
      %p35 = scmp.ne.s32.totalorder %s24, %s27
      %p36 = scmp.eq.s32.totalorder %s19, 1
      %p37 = por %p35, %p36
      %p38 = scmp.ne.s32.totalorder %s27, %s28
      %p39 = scmp.eq.s32.totalorder %s19, 0
      %p40 = por %p38, %p39
      %p41 = scmp.ne.s32.totalorder %s27, %s28
      %p42 = scmp.eq.s32.totalorder %s20, 1
      %p43 = por %p41, %p42
      %p45 = scmp.ne.s32.totalorder %s28, %s44
      %p46 = scmp.eq.s32.totalorder %s20, 0
      %p47 = por %p45, %p46
      %s49 = sadd.s32 %s48, 1
      %p52 = scmp.eq.s32.totalorder %s14, 1
      %p53 = scmp.ne.s32.totalorder %s48, %s50
      %p54 = scmp.eq.s32.totalorder %s14, 0
      %p55 = por %p53, %p54
      %p56 = scmp.ne.s32.totalorder %s48, %s50
      %p57 = scmp.eq.s32.totalorder %s19, 1
      %p58 = por %p56, %p57
      %p59 = scmp.ne.s32.totalorder %s50, %s51
      %p60 = scmp.eq.s32.totalorder %s19, 0
      %p61 = por %p59, %p60
      %p62 = scmp.ne.s32.totalorder %s50, %s51
      %p63 = scmp.eq.s32.totalorder %s20, 1
      %p64 = por %p62, %p63
      %p66 = scmp.ne.s32.totalorder %s51, %s65
      %p67 = scmp.eq.s32.totalorder %s20, 0
      %p68 = por %p66, %p67
      %s70 = sadd.s32 %s69, 1
      %p73 = scmp.eq.s32.totalorder %s14, 1
      %p74 = scmp.ne.s32.totalorder %s69, %s71
      %p75 = scmp.eq.s32.totalorder %s14, 0
      %p76 = por %p74, %p75
      %p77 = scmp.ne.s32.totalorder %s69, %s71
      %p78 = scmp.eq.s32.totalorder %s19, 1
      %p79 = por %p77, %p78
      %p80 = scmp.ne.s32.totalorder %s71, %s72
      %p81 = scmp.eq.s32.totalorder %s19, 0
      %p82 = por %p80, %p81
      %p83 = scmp.ne.s32.totalorder %s71, %s72
      %p84 = scmp.eq.s32.totalorder %s20, 1
      %p85 = por %p83, %p84
      %p87 = scmp.ne.s32.totalorder %s72, %s86
      %p88 = scmp.eq.s32.totalorder %s20, 0
      %p89 = por %p87, %p88
      %s91 = sadd.s32 %s90, 1
      %p94 = scmp.eq.s32.totalorder %s14, 1
      %p95 = scmp.ne.s32.totalorder %s90, %s92
      %p96 = scmp.eq.s32.totalorder %s14, 0
      %p97 = por %p95, %p96
      %p98 = scmp.ne.s32.totalorder %s90, %s92
      %p99 = scmp.eq.s32.totalorder %s19, 1
      %p100 = por %p98, %p99
      %p101 = scmp.ne.s32.totalorder %s92, %s93
      %p102 = scmp.eq.s32.totalorder %s19, 0
      %p103 = por %p101, %p102
      %p104 = scmp.ne.s32.totalorder %s92, %s93
      %p105 = scmp.eq.s32.totalorder %s20, 1
      %p106 = por %p104, %p105
      %p108 = scmp.ne.s32.totalorder %s93, %s107
      %p109 = scmp.eq.s32.totalorder %s20, 0
      %p110 = por %p108, %p109
      %s112 = sadd.s32 %s111, 1
      %p115 = scmp.eq.s32.totalorder %s14, 1
      %p116 = scmp.ne.s32.totalorder %s111, %s113
      %p117 = scmp.eq.s32.totalorder %s14, 0
      %p118 = por %p116, %p117
      %p119 = scmp.ne.s32.totalorder %s111, %s113
      %p120 = scmp.eq.s32.totalorder %s19, 1
      %p121 = por %p119, %p120
      %p122 = scmp.ne.s32.totalorder %s113, %s114
      %p123 = scmp.eq.s32.totalorder %s19, 0
      %p124 = por %p122, %p123
      %p125 = scmp.ne.s32.totalorder %s113, %s114
      %p126 = scmp.eq.s32.totalorder %s20, 1
      %p127 = por %p125, %p126
      %p129 = scmp.ne.s32.totalorder %s114, %s128
      %p130 = scmp.eq.s32.totalorder %s20, 0
      %p131 = por %p129, %p130
      %s133 = sadd.s32 %s132, 1
      %p136 = scmp.eq.s32.totalorder %s14, 1
      %p137 = scmp.ne.s32.totalorder %s132, %s134
      %p138 = scmp.eq.s32.totalorder %s14, 0
      %p139 = por %p137, %p138
      %p140 = scmp.ne.s32.totalorder %s132, %s134
      %p141 = scmp.eq.s32.totalorder %s19, 1
      %p142 = por %p140, %p141
      %p143 = scmp.ne.s32.totalorder %s134, %s135
      %p144 = scmp.eq.s32.totalorder %s19, 0
      %p145 = por %p143, %p144
      %p146 = scmp.ne.s32.totalorder %s134, %s135
      %p147 = scmp.eq.s32.totalorder %s20, 1
      %p148 = por %p146, %p147
      %p150 = scmp.ne.s32.totalorder %s135, %s149
      %p151 = scmp.eq.s32.totalorder %s20, 0
      %p152 = por %p150, %p151
      %s154 = sadd.s32 %s153, 1
      %p157 = scmp.eq.s32.totalorder %s14, 1
      %p158 = scmp.ne.s32.totalorder %s153, %s155
      %p159 = scmp.eq.s32.totalorder %s14, 0
      %p160 = por %p158, %p159
      %p161 = scmp.ne.s32.totalorder %s153, %s155
      %p162 = scmp.eq.s32.totalorder %s19, 1
      %p163 = por %p161, %p162
      %p164 = scmp.ne.s32.totalorder %s155, %s156
      %p165 = scmp.eq.s32.totalorder %s19, 0
      %p166 = por %p164, %p165
      %p167 = scmp.ne.s32.totalorder %s155, %s156
      %p168 = scmp.eq.s32.totalorder %s20, 1
      %p169 = por %p167, %p168
      %p171 = scmp.ne.s32.totalorder %s156, %s170
      %p172 = scmp.eq.s32.totalorder %s20, 0
      %p173 = por %p171, %p172
      %s174 = ssub.s32 %s14, %s21
      %p175 = scmp.eq.s32.totalorder %s174, 0
      %s177 = sadd.s32 %s176, 1
      %s178 = scalar_select %p175, %s176, %s177
      %p181 = pneg %p175
      %p182 = scmp.eq.s32.totalorder %s14, 1
      %p183 = por %p181, %p182
      %p184 = scmp.ne.s32.totalorder %s176, %s179
      %p185 = scmp.eq.s32.totalorder %s14, 0
      %p186 = por %p184, %p185
      %p187 = scmp.ne.s32.totalorder %s176, %s179
      %p188 = scmp.eq.s32.totalorder %s19, 1
      %p189 = por %p187, %p188
      %p190 = scmp.ne.s32.totalorder %s179, %s180
      %p191 = scmp.eq.s32.totalorder %s19, 0
      %p192 = por %p190, %p191
      %p193 = scmp.ne.s32.totalorder %s179, %s180
      %p194 = scmp.eq.s32.totalorder %s20, 1
      %p195 = por %p193, %p194
      %p197 = scmp.ne.s32.totalorder %s180, %s196
      %p198 = scmp.eq.s32.totalorder %s20, 0
      %p199 = por %p197, %p198
      %p200 = scmp.le.s32.totalorder 1, %s14
      %p201 = scmp.lt.s32.totalorder %s14, 3
      %p202 = pnand %p200, %p201
      %p203 = pneg %p202
      // Predicated region
      $region9: #{conv_block_forward.1} parent=5 // pred_check
        _
      $region10: #{conv_block_forward.1} parent=5 // pred_check_branch
        %205 = sbr.rel (%p202) target = $region12
      $region11: #{conv_block_forward.1} parent=5 // pred_region
        %s206 = ssub.s32 %s14, 1
        // Predicated region
        $region13: #{conv_block_forward.1} parent=11 // pred_check
          %p207 = pneg %p61
        $region14: #{conv_block_forward.1} parent=11 // pred_check_branch
          %209 = sbr.rel (%p207) target = $region16
        $region15: #{conv_block_forward.1} parent=11 // pred_region
          _
        $region16: #{conv_block_forward.1} parent=11 // pred_fallthru
          _
        // Predicated region
        $region17: #{conv_block_forward.1} parent=11 // pred_check
          %p210 = pneg %p82
        $region18: #{conv_block_forward.1} parent=11 // pred_check_branch
          %212 = sbr.rel (%p210) target = $region20
        $region19: #{conv_block_forward.1} parent=11 // pred_region
          _
        $region20: #{conv_block_forward.1} parent=11 // pred_fallthru
          _
        // Predicated region
        $region21: #{conv_block_forward.1} parent=11 // pred_check
          %p213 = pneg %p103
        $region22: #{conv_block_forward.1} parent=11 // pred_check_branch
          %215 = sbr.rel (%p213) target = $region24
        $region23: #{conv_block_forward.1} parent=11 // pred_region
          _
        $region24: #{conv_block_forward.1} parent=11 // pred_fallthru
          _
        // Predicated region
        $region25: #{conv_block_forward.1} parent=11 // pred_check
          %p216 = pneg %p124
        $region26: #{conv_block_forward.1} parent=11 // pred_check_branch
          %218 = sbr.rel (%p216) target = $region28
        $region27: #{conv_block_forward.1} parent=11 // pred_region
          _
        $region28: #{conv_block_forward.1} parent=11 // pred_fallthru
          _
        // Predicated region
        $region29: #{conv_block_forward.1} parent=11 // pred_check
          %p219 = pneg %p145
        $region30: #{conv_block_forward.1} parent=11 // pred_check_branch
          %221 = sbr.rel (%p219) target = $region32
        $region31: #{conv_block_forward.1} parent=11 // pred_region
          _
        $region32: #{conv_block_forward.1} parent=11 // pred_fallthru
          _
        // Predicated region
        $region33: #{conv_block_forward.1} parent=11 // pred_check
          %p222 = pneg %p166
        $region34: #{conv_block_forward.1} parent=11 // pred_check_branch
          %224 = sbr.rel (%p222) target = $region36
        $region35: #{conv_block_forward.1} parent=11 // pred_region
          %s226 = ssub.s32 32768, 32768
          %227 = vsyncadd [#allocation3], %s226
          %s228 = sshll.u32 [#allocation2], 4
          %s229 = int_to_ptr.vmem [resolvable:$true] %s228
          %234 = dma.hbm_to_vmem [thread:$0]  %s6, 32768, %s229, [#allocation3], 256, 256, 16
        $region36: #{conv_block_forward.1} parent=11 // pred_fallthru
          _
      $region12: #{conv_block_forward.1} parent=5 // pred_fallthru
        _
      %p235 = scmp.lt.s32.totalorder %s14, 2
      // Predicated region
      $region37: #{conv_block_forward.1} parent=5 // pred_check
        %p236 = pneg %p235
      $region38: #{conv_block_forward.1} parent=5 // pred_check_branch
        %238 = sbr.rel (%p236) target = $region40
      $region39: #{conv_block_forward.1} parent=5 // pred_region
        // Predicated region
        $region41: #{conv_block_forward.1} parent=39 // pred_check
          %p239 = pneg %p34
        $region42: #{conv_block_forward.1} parent=39 // pred_check_branch
          %241 = sbr.rel (%p239) target = $region44
        $region43: #{conv_block_forward.1} parent=39 // pred_region
          %s242 = smul.u32 4, %s14
          %p243 = scmp.lt.s32.totalorder %s242, 7
          %s244 = scalar_select %p243, %s242, 7
          %s245 = smul.addr %s244, 2
          %s246 = smul.addr %s245, 8
          %s247 = scalar_lea.vmem %s0, %s246
          %s248 = smul.u32 4, %s14
        $region44: #{conv_block_forward.1} parent=39 // pred_fallthru
          _
      $region40: #{conv_block_forward.1} parent=5 // pred_fallthru
        _
      %p249 = scmp.le.s32.totalorder 1, %s14
      %p250 = scmp.lt.s32.totalorder %s14, 3
      %p251 = pnand %p249, %p250
      %p252 = pneg %p251
      // Predicated region
      $region45: #{conv_block_forward.1} parent=5 // pred_check
        _
      $region46: #{conv_block_forward.1} parent=5 // pred_check_branch
        %254 = sbr.rel (%p251) target = $region48
      $region47: #{conv_block_forward.1} parent=5 // pred_region
        %s255 = ssub.s32 %s14, 1
        // Predicated region
        $region49: #{conv_block_forward.1} parent=47 // pred_check
          %p256 = pneg %p166
        $region50: #{conv_block_forward.1} parent=47 // pred_check_branch
          %258 = sbr.rel (%p256) target = $region52
        $region51: #{conv_block_forward.1} parent=47 // pred_region
          %259 = dma.done [#allocation3], 32768
        $region52: #{conv_block_forward.1} parent=47 // pred_fallthru
          _
        %s260 = smul.u32 4, %s19
        %p261 = scmp.lt.s32.totalorder %s260, 7
        %s262 = scalar_select %p261, %s260, 7
        %s263 = smul.addr %s262, 2
        %s264 = smul.addr %s263, 8
        %s265 = scalar_lea.vmem %s0, %s264
        %p266 = pneg %p40
        %p267 = pneg %p37
        %p268 = pneg %p61
        %p269 = pneg %p58
        %p270 = pneg %p82
        %p271 = pneg %p79
        %p272 = pneg %p103
        %p273 = pneg %p100
        %p274 = pneg %p124
        %p275 = pneg %p121
        %p276 = pneg %p145
        %p277 = pneg %p142
        %p278 = pneg %p166
        %p279 = pneg %p163
        %p280 = pneg %p192
        %p281 = pneg %p189
        %p282 = scmp.lt.s32.totalorder %s19, 1
        %s283 = scalar_select %p282, %s19, 1
        %s284 = smul.addr %s283, 2
        %s285 = smul.addr %s284, 8
        %s286 = scalar_lea.vmem %s7, %s285
        %s287 = smul.u32 4, %s19
        %p288 = scmp.lt.s32.totalorder %s287, 7
        %s289 = scalar_select %p288, %s287, 7
        %s290 = smul.addr %s289, 2
        %s291 = smul.addr %s290, 8
        %s292 = scalar_lea.vmem %s0, %s291
        %s293 = smul.u32 4, %s19
        %p294 = scmp.lt.s32.totalorder %s19, 1
        %s295 = scalar_select %p294, %s19, 1
        %s296 = smul.addr %s295, 2
        %s297 = smul.addr %s296, 8
        %s298 = scalar_lea.vmem %s7, %s297
        %v299 = vld [vmem:[%s292] sm:$0xff]
        %v300 = vld [vmem:[%s292 + $0x8] sm:$0xff]
        %s301 = scalar_lea.vmem %s292, 16
        %v302 = vld [vmem:[%s301] sm:$0xff]
        %v303 = vld [vmem:[%s301 + $0x8] sm:$0xff]
        %s304 = scalar_lea.vmem %s292, 32
        %v305 = vld [vmem:[%s304] sm:$0xff]
        %v306 = vld [vmem:[%s304 + $0x8] sm:$0xff]
        %s307 = scalar_lea.vmem %s292, 48
        %v308 = vld [vmem:[%s307] sm:$0xff]
        %v309 = vld [vmem:[%s307 + $0x8] sm:$0xff]
        %310 = vrot.lane.b32.xlu0 %v299, 17
        %v311 = vpop.permute.xlu0 %310
        %312 = vrot.lane.b32.xlu0 %v300, 17
        %v313 = vpop.permute.xlu0 %312
        %314 = vrot.lane.b32.xlu0 %v302, 17
        %v315 = vpop.permute.xlu0 %314
        %316 = vrot.lane.b32.xlu0 %v303, 17
        %v317 = vpop.permute.xlu0 %316
        %318 = vrot.lane.b32.xlu0 %v305, 17
        %v319 = vpop.permute.xlu0 %318
        %320 = vrot.lane.b32.xlu0 %v306, 17
        %v321 = vpop.permute.xlu0 %320
        %322 = vrot.lane.b32.xlu0 %v308, 17
        %v323 = vpop.permute.xlu0 %322
        %324 = vrot.lane.b32.xlu0 %v309, 17
        %v325 = vpop.permute.xlu0 %324
        %v326 = vlaneseq
        %v327 = vand.u32 %v326, 127
        %vm328 = vcmp.lt.s32.totalorder %v327, 17
        %v329 = vsel %vm328, %v323, %v325
        %v330 = vsel %vm328, %v321, %v323
        %v331 = vsel %vm328, %v319, %v321
        %v332 = vsel %vm328, %v317, %v319
        %v333 = vsel %vm328, %v315, %v317
        %v334 = vsel %vm328, %v313, %v315
        %v335 = vsel %vm328, %v311, %v313
        %v336 = vsel %vm328, %v325, %v311
        %v337 = vld [vmem:[%s1] sm:$0xff]
        %v339 = vlaneseq
        %v340 = vshrl.u32 %v339, 7
        %v341 = vsub.s32 0, %v340
        %v342 = vrot.slane %v337, %v341
        %v343 = vlaneseq
        %v344 = vshrl.u32 %v343, 7
        %v345 = vsub.s32 1, %v344
        %v346 = vrot.slane %v337, %v345
        %v347 = vlaneseq
        %v348 = vshrl.u32 %v347, 7
        %v349 = vsub.s32 2, %v348
        %v350 = vrot.slane %v337, %v349
        %v351 = vlaneseq
        %v352 = vshrl.u32 %v351, 7
        %v353 = vsub.s32 3, %v352
        %v354 = vrot.slane %v337, %v353
        %v355 = vlaneseq
        %v356 = vshrl.u32 %v355, 7
        %v357 = vsub.s32 4, %v356
        %v358 = vrot.slane %v337, %v357
        %v359 = vlaneseq
        %v360 = vshrl.u32 %v359, 7
        %v361 = vsub.s32 5, %v360
        %v362 = vrot.slane %v337, %v361
        %v363 = vlaneseq
        %v364 = vshrl.u32 %v363, 7
        %v365 = vsub.s32 6, %v364
        %v366 = vrot.slane %v337, %v365
        %v367 = vlaneseq
        %v368 = vshrl.u32 %v367, 7
        %v369 = vsub.s32 7, %v368
        %v370 = vrot.slane %v337, %v369
        %v379 = vmul.f32 %v336, %v342
        %v380 = vmul.f32 %v335, %v346
        %v381 = vmul.f32 %v334, %v350
        %v382 = vmul.f32 %v333, %v354
        %v383 = vmul.f32 %v332, %v358
        %v384 = vmul.f32 %v331, %v362
        %v385 = vmul.f32 %v330, %v366
        %v386 = vmul.f32 %v329, %v370
        %387 = vrot.lane.b32.xlu0 %v299, 16
        %v388 = vpop.permute.xlu0 %387
        %389 = vrot.lane.b32.xlu0 %v300, 16
        %v390 = vpop.permute.xlu0 %389
        %391 = vrot.lane.b32.xlu0 %v302, 16
        %v392 = vpop.permute.xlu0 %391
        %393 = vrot.lane.b32.xlu0 %v303, 16
        %v394 = vpop.permute.xlu0 %393
        %395 = vrot.lane.b32.xlu0 %v305, 16
        %v396 = vpop.permute.xlu0 %395
        %397 = vrot.lane.b32.xlu0 %v306, 16
        %v398 = vpop.permute.xlu0 %397
        %399 = vrot.lane.b32.xlu0 %v308, 16
        %v400 = vpop.permute.xlu0 %399
        %401 = vrot.lane.b32.xlu0 %v309, 16
        %v402 = vpop.permute.xlu0 %401
        %vm403 = vcmp.lt.s32.totalorder %v327, 16
        %v404 = vsel %vm403, %v400, %v402
        %v405 = vsel %vm403, %v398, %v400
        %v406 = vsel %vm403, %v396, %v398
        %v407 = vsel %vm403, %v394, %v396
        %v408 = vsel %vm403, %v392, %v394
        %v409 = vsel %vm403, %v390, %v392
        %v410 = vsel %vm403, %v388, %v390
        %v411 = vsel %vm403, %v402, %v388
        %s412 = scalar_lea.vmem %s1, 8
        %v413 = vld [vmem:[%s412] sm:$0xff]
        %v415 = vlaneseq
        %v416 = vshrl.u32 %v415, 7
        %v417 = vsub.s32 0, %v416
        %v418 = vrot.slane %v413, %v417
        %v419 = vlaneseq
        %v420 = vshrl.u32 %v419, 7
        %v421 = vsub.s32 1, %v420
        %v422 = vrot.slane %v413, %v421
        %v423 = vlaneseq
        %v424 = vshrl.u32 %v423, 7
        %v425 = vsub.s32 2, %v424
        %v426 = vrot.slane %v413, %v425
        %v427 = vlaneseq
        %v428 = vshrl.u32 %v427, 7
        %v429 = vsub.s32 3, %v428
        %v430 = vrot.slane %v413, %v429
        %v431 = vlaneseq
        %v432 = vshrl.u32 %v431, 7
        %v433 = vsub.s32 4, %v432
        %v434 = vrot.slane %v413, %v433
        %v435 = vlaneseq
        %v436 = vshrl.u32 %v435, 7
        %v437 = vsub.s32 5, %v436
        %v438 = vrot.slane %v413, %v437
        %v439 = vlaneseq
        %v440 = vshrl.u32 %v439, 7
        %v441 = vsub.s32 6, %v440
        %v442 = vrot.slane %v413, %v441
        %v443 = vlaneseq
        %v444 = vshrl.u32 %v443, 7
        %v445 = vsub.s32 7, %v444
        %v446 = vrot.slane %v413, %v445
        %v455 = vmul.f32 %v411, %v418
        %v456 = vmul.f32 %v410, %v422
        %v457 = vmul.f32 %v409, %v426
        %v458 = vmul.f32 %v408, %v430
        %v459 = vmul.f32 %v407, %v434
        %v460 = vmul.f32 %v406, %v438
        %v461 = vmul.f32 %v405, %v442
        %v462 = vmul.f32 %v404, %v446
        %463 = vrot.lane.b32.xlu0 %v299, 15
        %v464 = vpop.permute.xlu0 %463
        %465 = vrot.lane.b32.xlu0 %v300, 15
        %v466 = vpop.permute.xlu0 %465
        %467 = vrot.lane.b32.xlu0 %v302, 15
        %v468 = vpop.permute.xlu0 %467
        %469 = vrot.lane.b32.xlu0 %v303, 15
        %v470 = vpop.permute.xlu0 %469
        %471 = vrot.lane.b32.xlu0 %v305, 15
        %v472 = vpop.permute.xlu0 %471
        %473 = vrot.lane.b32.xlu0 %v306, 15
        %v474 = vpop.permute.xlu0 %473
        %475 = vrot.lane.b32.xlu0 %v308, 15
        %v476 = vpop.permute.xlu0 %475
        %477 = vrot.lane.b32.xlu0 %v309, 15
        %v478 = vpop.permute.xlu0 %477
        %vm479 = vcmp.lt.s32.totalorder %v327, 15
        %v480 = vsel %vm479, %v476, %v478
        %v481 = vsel %vm479, %v474, %v476
        %v482 = vsel %vm479, %v472, %v474
        %v483 = vsel %vm479, %v470, %v472
        %v484 = vsel %vm479, %v468, %v470
        %v485 = vsel %vm479, %v466, %v468
        %v486 = vsel %vm479, %v464, %v466
        %v487 = vsel %vm479, %v478, %v464
        %s488 = scalar_lea.vmem %s1, 16
        %v489 = vld [vmem:[%s488] sm:$0xff]
        %v491 = vlaneseq
        %v492 = vshrl.u32 %v491, 7
        %v493 = vsub.s32 0, %v492
        %v494 = vrot.slane %v489, %v493
        %v495 = vlaneseq
        %v496 = vshrl.u32 %v495, 7
        %v497 = vsub.s32 1, %v496
        %v498 = vrot.slane %v489, %v497
        %v499 = vlaneseq
        %v500 = vshrl.u32 %v499, 7
        %v501 = vsub.s32 2, %v500
        %v502 = vrot.slane %v489, %v501
        %v503 = vlaneseq
        %v504 = vshrl.u32 %v503, 7
        %v505 = vsub.s32 3, %v504
        %v506 = vrot.slane %v489, %v505
        %v507 = vlaneseq
        %v508 = vshrl.u32 %v507, 7
        %v509 = vsub.s32 4, %v508
        %v510 = vrot.slane %v489, %v509
        %v511 = vlaneseq
        %v512 = vshrl.u32 %v511, 7
        %v513 = vsub.s32 5, %v512
        %v514 = vrot.slane %v489, %v513
        %v515 = vlaneseq
        %v516 = vshrl.u32 %v515, 7
        %v517 = vsub.s32 6, %v516
        %v518 = vrot.slane %v489, %v517
        %v519 = vlaneseq
        %v520 = vshrl.u32 %v519, 7
        %v521 = vsub.s32 7, %v520
        %v522 = vrot.slane %v489, %v521
        %v531 = vmul.f32 %v487, %v494
        %v532 = vmul.f32 %v486, %v498
        %v533 = vmul.f32 %v485, %v502
        %v534 = vmul.f32 %v484, %v506
        %v535 = vmul.f32 %v483, %v510
        %v536 = vmul.f32 %v482, %v514
        %v537 = vmul.f32 %v481, %v518
        %v538 = vmul.f32 %v480, %v522
        %539 = vrot.lane.b32.xlu0 %v299, 1
        %v540 = vpop.permute.xlu0 %539
        %541 = vrot.lane.b32.xlu0 %v300, 1
        %v542 = vpop.permute.xlu0 %541
        %543 = vrot.lane.b32.xlu0 %v302, 1
        %v544 = vpop.permute.xlu0 %543
        %545 = vrot.lane.b32.xlu0 %v303, 1
        %v546 = vpop.permute.xlu0 %545
        %547 = vrot.lane.b32.xlu0 %v305, 1
        %v548 = vpop.permute.xlu0 %547
        %549 = vrot.lane.b32.xlu0 %v306, 1
        %v550 = vpop.permute.xlu0 %549
        %551 = vrot.lane.b32.xlu0 %v308, 1
        %v552 = vpop.permute.xlu0 %551
        %553 = vrot.lane.b32.xlu0 %v309, 1
        %v554 = vpop.permute.xlu0 %553
        %vm555 = vcmp.lt.s32.totalorder %v327, 1
        %v556 = vsel %vm555, %v552, %v554
        %v557 = vsel %vm555, %v550, %v552
        %v558 = vsel %vm555, %v548, %v550
        %v559 = vsel %vm555, %v546, %v548
        %v560 = vsel %vm555, %v544, %v546
        %v561 = vsel %vm555, %v542, %v544
        %v562 = vsel %vm555, %v540, %v542
        %v563 = vsel %vm555, %v554, %v540
        %s564 = scalar_lea.vmem %s1, 24
        %v565 = vld [vmem:[%s564] sm:$0xff]
        %v567 = vlaneseq
        %v568 = vshrl.u32 %v567, 7
        %v569 = vsub.s32 0, %v568
        %v570 = vrot.slane %v565, %v569
        %v571 = vlaneseq
        %v572 = vshrl.u32 %v571, 7
        %v573 = vsub.s32 1, %v572
        %v574 = vrot.slane %v565, %v573
        %v575 = vlaneseq
        %v576 = vshrl.u32 %v575, 7
        %v577 = vsub.s32 2, %v576
        %v578 = vrot.slane %v565, %v577
        %v579 = vlaneseq
        %v580 = vshrl.u32 %v579, 7
        %v581 = vsub.s32 3, %v580
        %v582 = vrot.slane %v565, %v581
        %v583 = vlaneseq
        %v584 = vshrl.u32 %v583, 7
        %v585 = vsub.s32 4, %v584
        %v586 = vrot.slane %v565, %v585
        %v587 = vlaneseq
        %v588 = vshrl.u32 %v587, 7
        %v589 = vsub.s32 5, %v588
        %v590 = vrot.slane %v565, %v589
        %v591 = vlaneseq
        %v592 = vshrl.u32 %v591, 7
        %v593 = vsub.s32 6, %v592
        %v594 = vrot.slane %v565, %v593
        %v595 = vlaneseq
        %v596 = vshrl.u32 %v595, 7
        %v597 = vsub.s32 7, %v596
        %v598 = vrot.slane %v565, %v597
        %v607 = vmul.f32 %v563, %v570
        %v608 = vmul.f32 %v562, %v574
        %v609 = vmul.f32 %v561, %v578
        %v610 = vmul.f32 %v560, %v582
        %v611 = vmul.f32 %v559, %v586
        %v612 = vmul.f32 %v558, %v590
        %v613 = vmul.f32 %v557, %v594
        %v614 = vmul.f32 %v556, %v598
        %615 = vrot.lane.b32.xlu0 %v299, 127
        %v616 = vpop.permute.xlu0 %615
        %617 = vrot.lane.b32.xlu0 %v300, 127
        %v618 = vpop.permute.xlu0 %617
        %619 = vrot.lane.b32.xlu0 %v302, 127
        %v620 = vpop.permute.xlu0 %619
        %621 = vrot.lane.b32.xlu0 %v303, 127
        %v622 = vpop.permute.xlu0 %621
        %623 = vrot.lane.b32.xlu0 %v305, 127
        %v624 = vpop.permute.xlu0 %623
        %625 = vrot.lane.b32.xlu0 %v306, 127
        %v626 = vpop.permute.xlu0 %625
        %627 = vrot.lane.b32.xlu0 %v308, 127
        %v628 = vpop.permute.xlu0 %627
        %629 = vrot.lane.b32.xlu0 %v309, 127
        %v630 = vpop.permute.xlu0 %629
        %vm631 = vcmp.lt.s32.totalorder %v327, 127
        %v632 = vsel %vm631, %v628, %v630
        %v633 = vsel %vm631, %v626, %v628
        %v634 = vsel %vm631, %v624, %v626
        %v635 = vsel %vm631, %v622, %v624
        %v636 = vsel %vm631, %v620, %v622
        %v637 = vsel %vm631, %v618, %v620
        %v638 = vsel %vm631, %v616, %v618
        %v639 = vsel %vm631, %v630, %v616
        %s640 = scalar_lea.vmem %s1, 40
        %v641 = vld [vmem:[%s640] sm:$0xff]
        %v643 = vlaneseq
        %v644 = vshrl.u32 %v643, 7
        %v645 = vsub.s32 0, %v644
        %v646 = vrot.slane %v641, %v645
        %v647 = vlaneseq
        %v648 = vshrl.u32 %v647, 7
        %v649 = vsub.s32 1, %v648
        %v650 = vrot.slane %v641, %v649
        %v651 = vlaneseq
        %v652 = vshrl.u32 %v651, 7
        %v653 = vsub.s32 2, %v652
        %v654 = vrot.slane %v641, %v653
        %v655 = vlaneseq
        %v656 = vshrl.u32 %v655, 7
        %v657 = vsub.s32 3, %v656
        %v658 = vrot.slane %v641, %v657
        %v659 = vlaneseq
        %v660 = vshrl.u32 %v659, 7
        %v661 = vsub.s32 4, %v660
        %v662 = vrot.slane %v641, %v661
        %v663 = vlaneseq
        %v664 = vshrl.u32 %v663, 7
        %v665 = vsub.s32 5, %v664
        %v666 = vrot.slane %v641, %v665
        %v667 = vlaneseq
        %v668 = vshrl.u32 %v667, 7
        %v669 = vsub.s32 6, %v668
        %v670 = vrot.slane %v641, %v669
        %v671 = vlaneseq
        %v672 = vshrl.u32 %v671, 7
        %v673 = vsub.s32 7, %v672
        %v674 = vrot.slane %v641, %v673
        %v683 = vmul.f32 %v638, %v646
        %v684 = vmul.f32 %v637, %v650
        %v685 = vmul.f32 %v636, %v654
        %v686 = vmul.f32 %v635, %v658
        %v687 = vmul.f32 %v634, %v662
        %v688 = vmul.f32 %v633, %v666
        %v689 = vmul.f32 %v632, %v670
        %v690 = vmul.f32 %v639, %v674
        %691 = vrot.lane.b32.xlu0 %v299, 113
        %v692 = vpop.permute.xlu0 %691
        %693 = vrot.lane.b32.xlu0 %v300, 113
        %v694 = vpop.permute.xlu0 %693
        %695 = vrot.lane.b32.xlu0 %v302, 113
        %v696 = vpop.permute.xlu0 %695
        %697 = vrot.lane.b32.xlu0 %v303, 113
        %v698 = vpop.permute.xlu0 %697
        %699 = vrot.lane.b32.xlu0 %v305, 113
        %v700 = vpop.permute.xlu0 %699
        %701 = vrot.lane.b32.xlu0 %v306, 113
        %v702 = vpop.permute.xlu0 %701
        %703 = vrot.lane.b32.xlu0 %v308, 113
        %v704 = vpop.permute.xlu0 %703
        %705 = vrot.lane.b32.xlu0 %v309, 113
        %v706 = vpop.permute.xlu0 %705
        %vm707 = vcmp.lt.s32.totalorder %v327, 113
        %v708 = vsel %vm707, %v704, %v706
        %v709 = vsel %vm707, %v702, %v704
        %v710 = vsel %vm707, %v700, %v702
        %v711 = vsel %vm707, %v698, %v700
        %v712 = vsel %vm707, %v696, %v698
        %v713 = vsel %vm707, %v694, %v696
        %v714 = vsel %vm707, %v692, %v694
        %v715 = vsel %vm707, %v706, %v692
        %s716 = scalar_lea.vmem %s1, 48
        %v717 = vld [vmem:[%s716] sm:$0xff]
        %v719 = vlaneseq
        %v720 = vshrl.u32 %v719, 7
        %v721 = vsub.s32 0, %v720
        %v722 = vrot.slane %v717, %v721
        %v723 = vlaneseq
        %v724 = vshrl.u32 %v723, 7
        %v725 = vsub.s32 1, %v724
        %v726 = vrot.slane %v717, %v725
        %v727 = vlaneseq
        %v728 = vshrl.u32 %v727, 7
        %v729 = vsub.s32 2, %v728
        %v730 = vrot.slane %v717, %v729
        %v731 = vlaneseq
        %v732 = vshrl.u32 %v731, 7
        %v733 = vsub.s32 3, %v732
        %v734 = vrot.slane %v717, %v733
        %v735 = vlaneseq
        %v736 = vshrl.u32 %v735, 7
        %v737 = vsub.s32 4, %v736
        %v738 = vrot.slane %v717, %v737
        %v739 = vlaneseq
        %v740 = vshrl.u32 %v739, 7
        %v741 = vsub.s32 5, %v740
        %v742 = vrot.slane %v717, %v741
        %v743 = vlaneseq
        %v744 = vshrl.u32 %v743, 7
        %v745 = vsub.s32 6, %v744
        %v746 = vrot.slane %v717, %v745
        %v747 = vlaneseq
        %v748 = vshrl.u32 %v747, 7
        %v749 = vsub.s32 7, %v748
        %v750 = vrot.slane %v717, %v749
        %v759 = vmul.f32 %v714, %v722
        %v760 = vmul.f32 %v713, %v726
        %v761 = vmul.f32 %v712, %v730
        %v762 = vmul.f32 %v711, %v734
        %v763 = vmul.f32 %v710, %v738
        %v764 = vmul.f32 %v709, %v742
        %v765 = vmul.f32 %v708, %v746
        %v766 = vmul.f32 %v715, %v750
        %767 = vrot.lane.b32.xlu0 %v299, 112
        %v768 = vpop.permute.xlu0 %767
        %769 = vrot.lane.b32.xlu0 %v300, 112
        %v770 = vpop.permute.xlu0 %769
        %771 = vrot.lane.b32.xlu0 %v302, 112
        %v772 = vpop.permute.xlu0 %771
        %773 = vrot.lane.b32.xlu0 %v303, 112
        %v774 = vpop.permute.xlu0 %773
        %775 = vrot.lane.b32.xlu0 %v305, 112
        %v776 = vpop.permute.xlu0 %775
        %777 = vrot.lane.b32.xlu0 %v306, 112
        %v778 = vpop.permute.xlu0 %777
        %779 = vrot.lane.b32.xlu0 %v308, 112
        %v780 = vpop.permute.xlu0 %779
        %781 = vrot.lane.b32.xlu0 %v309, 112
        %v782 = vpop.permute.xlu0 %781
        %vm783 = vcmp.lt.s32.totalorder %v327, 112
        %v784 = vsel %vm783, %v780, %v782
        %v785 = vsel %vm783, %v778, %v780
        %v786 = vsel %vm783, %v776, %v778
        %v787 = vsel %vm783, %v774, %v776
        %v788 = vsel %vm783, %v772, %v774
        %v789 = vsel %vm783, %v770, %v772
        %v790 = vsel %vm783, %v768, %v770
        %v791 = vsel %vm783, %v782, %v768
        %s792 = scalar_lea.vmem %s1, 56
        %v793 = vld [vmem:[%s792] sm:$0xff]
        %v795 = vlaneseq
        %v796 = vshrl.u32 %v795, 7
        %v797 = vsub.s32 0, %v796
        %v798 = vrot.slane %v793, %v797
        %v799 = vlaneseq
        %v800 = vshrl.u32 %v799, 7
        %v801 = vsub.s32 1, %v800
        %v802 = vrot.slane %v793, %v801
        %v803 = vlaneseq
        %v804 = vshrl.u32 %v803, 7
        %v805 = vsub.s32 2, %v804
        %v806 = vrot.slane %v793, %v805
        %v807 = vlaneseq
        %v808 = vshrl.u32 %v807, 7
        %v809 = vsub.s32 3, %v808
        %v810 = vrot.slane %v793, %v809
        %v811 = vlaneseq
        %v812 = vshrl.u32 %v811, 7
        %v813 = vsub.s32 4, %v812
        %v814 = vrot.slane %v793, %v813
        %v815 = vlaneseq
        %v816 = vshrl.u32 %v815, 7
        %v817 = vsub.s32 5, %v816
        %v818 = vrot.slane %v793, %v817
        %v819 = vlaneseq
        %v820 = vshrl.u32 %v819, 7
        %v821 = vsub.s32 6, %v820
        %v822 = vrot.slane %v793, %v821
        %v823 = vlaneseq
        %v824 = vshrl.u32 %v823, 7
        %v825 = vsub.s32 7, %v824
        %v826 = vrot.slane %v793, %v825
        %v835 = vmul.f32 %v790, %v798
        %v836 = vmul.f32 %v789, %v802
        %v837 = vmul.f32 %v788, %v806
        %v838 = vmul.f32 %v787, %v810
        %v839 = vmul.f32 %v786, %v814
        %v840 = vmul.f32 %v785, %v818
        %v841 = vmul.f32 %v784, %v822
        %v842 = vmul.f32 %v791, %v826
        %843 = vrot.lane.b32.xlu0 %v299, 111
        %v844 = vpop.permute.xlu0 %843
        %845 = vrot.lane.b32.xlu0 %v300, 111
        %v846 = vpop.permute.xlu0 %845
        %847 = vrot.lane.b32.xlu0 %v302, 111
        %v848 = vpop.permute.xlu0 %847
        %849 = vrot.lane.b32.xlu0 %v303, 111
        %v850 = vpop.permute.xlu0 %849
        %851 = vrot.lane.b32.xlu0 %v305, 111
        %v852 = vpop.permute.xlu0 %851
        %853 = vrot.lane.b32.xlu0 %v306, 111
        %v854 = vpop.permute.xlu0 %853
        %855 = vrot.lane.b32.xlu0 %v308, 111
        %v856 = vpop.permute.xlu0 %855
        %857 = vrot.lane.b32.xlu0 %v309, 111
        %v858 = vpop.permute.xlu0 %857
        %vm859 = vcmp.lt.s32.totalorder %v327, 111
        %v860 = vsel %vm859, %v856, %v858
        %v861 = vsel %vm859, %v854, %v856
        %v862 = vsel %vm859, %v852, %v854
        %v863 = vsel %vm859, %v850, %v852
        %v864 = vsel %vm859, %v848, %v850
        %v865 = vsel %vm859, %v846, %v848
        %v866 = vsel %vm859, %v844, %v846
        %v867 = vsel %vm859, %v858, %v844
        %s868 = scalar_lea.vmem %s1, 64
        %v869 = vld [vmem:[%s868] sm:$0xff]
        %v871 = vlaneseq
        %v872 = vshrl.u32 %v871, 7
        %v873 = vsub.s32 0, %v872
        %v874 = vrot.slane %v869, %v873
        %v875 = vlaneseq
        %v876 = vshrl.u32 %v875, 7
        %v877 = vsub.s32 1, %v876
        %v878 = vrot.slane %v869, %v877
        %v879 = vlaneseq
        %v880 = vshrl.u32 %v879, 7
        %v881 = vsub.s32 2, %v880
        %v882 = vrot.slane %v869, %v881
        %v883 = vlaneseq
        %v884 = vshrl.u32 %v883, 7
        %v885 = vsub.s32 3, %v884
        %v886 = vrot.slane %v869, %v885
        %v887 = vlaneseq
        %v888 = vshrl.u32 %v887, 7
        %v889 = vsub.s32 4, %v888
        %v890 = vrot.slane %v869, %v889
        %v891 = vlaneseq
        %v892 = vshrl.u32 %v891, 7
        %v893 = vsub.s32 5, %v892
        %v894 = vrot.slane %v869, %v893
        %v895 = vlaneseq
        %v896 = vshrl.u32 %v895, 7
        %v897 = vsub.s32 6, %v896
        %v898 = vrot.slane %v869, %v897
        %v899 = vlaneseq
        %v900 = vshrl.u32 %v899, 7
        %v901 = vsub.s32 7, %v900
        %v902 = vrot.slane %v869, %v901
        %v911 = vmul.f32 %v866, %v874
        %v912 = vmul.f32 %v865, %v878
        %v913 = vmul.f32 %v864, %v882
        %v914 = vmul.f32 %v863, %v886
        %v915 = vmul.f32 %v862, %v890
        %v916 = vmul.f32 %v861, %v894
        %v917 = vmul.f32 %v860, %v898
        %v918 = vmul.f32 %v867, %v902
        %v919 = vld [vmem:[%s2] sm:$0xff]
        %v920 = vld [vmem:[%s3] sm:$0xff]
        %922 = vset.pattern.permute.xlu0 0
        %923 = vperm.xlu0 %922, %v920
        %v924 = vpop.permute.xlu0 %923
        %vm926 = vcmask 588800
        %v928 = vsel %vm926, %v919, 0
        %930 = vmatprep.subr.mxu0 0.0
        %931 = vmatpush1.msra.mxu0 0.0
        %932 = vmatprep.subr.mxu0 0.0
        %933 = vmatpush1.msra.mxu0 0.0
        %934 = vmatprep.subr.mxu0 0.0
        %935 = vmatpush1.msra.mxu0 0.0
        %936 = vmatprep.subr.mxu0 0.0
        %937 = vmatpush1.msra.mxu0 0.0
        %938 = vmatprep.subr.mxu0 0.0
        %939 = vmatpush1.msra.mxu0 0.0
        %940 = vmatprep.subr.mxu0 0.0
        %941 = vmatpush1.msra.mxu0 0.0
        %942 = vmatprep.subr.mxu0 0.0
        %943 = vmatpush1.msra.mxu0 0.0
        %944 = vmatprep.subr.mxu0 %v912
        %945 = vmatpush1.msra.mxu0 %v911
        %946 = vmatprep.subr.mxu0 %v836
        %947 = vmatpush1.msra.mxu0 %v835
        %948 = vmatprep.subr.mxu0 %v760
        %949 = vmatpush1.msra.mxu0 %v759
        %950 = vmatprep.subr.mxu0 %v684
        %951 = vmatpush1.msra.mxu0 %v683
        %952 = vmatprep.subr.mxu0 %v300
        %953 = vmatpush1.msra.mxu0 %v299
        %954 = vmatprep.subr.mxu0 %v608
        %955 = vmatpush1.msra.mxu0 %v607
        %956 = vmatprep.subr.mxu0 %v532
        %957 = vmatpush1.msra.mxu0 %v531
        %958 = vmatprep.subr.mxu0 %v456
        %959 = vmatpush1.msra.mxu0 %v455
        %960 = vmatprep.subr.mxu0 %v380
        %961 = vmatpush1.msra.mxu0 %v379
        %962 = vmatprep.subr.mxu0 0.0
        %963 = vmatpush2.msra.mxu0 0.0
        %964 = vmatprep.subr.mxu0 0.0
        %965 = vmatpush2.msra.mxu0 0.0
        %966 = vmatprep.subr.mxu0 0.0
        %967 = vmatpush2.msra.mxu0 0.0
        %968 = vmatprep.subr.mxu0 0.0
        %969 = vmatpush2.msra.mxu0 0.0
        %970 = vmatprep.subr.mxu0 0.0
        %971 = vmatpush2.msra.mxu0 0.0
        %972 = vmatprep.subr.mxu0 0.0
        %973 = vmatpush2.msra.mxu0 0.0
        %974 = vmatprep.subr.mxu0 0.0
        %975 = vmatpush2.msra.mxu0 0.0
        %976 = vmatprep.subr.mxu0 0.0
        %977 = vmatpush2.msra.mxu0 0.0
        %978 = vmatprep.subr.mxu0 0.0
        %979 = vmatpush2.msra.mxu0 0.0
        %980 = vmatprep.subr.mxu0 0.0
        %981 = vmatpush2.msra.mxu0 0.0
        %982 = vmatprep.subr.mxu0 0.0
        %983 = vmatpush2.msra.mxu0 0.0
        %984 = vmatprep.subr.mxu0 0.0
        %985 = vmatpush2.msra.mxu0 0.0
        %986 = vmatprep.subr.mxu0 0.0
        %987 = vmatpush2.msra.mxu0 0.0
        %988 = vmatprep.subr.mxu0 0.0
        %989 = vmatpush2.msra.mxu0 0.0
        %990 = vmatprep.subr.mxu0 0.0
        %991 = vmatpush2.msra.mxu0 0.0
        %992 = vmatprep.subr.mxu0 0.0
        %993 = vmatpush2.msra.mxu0 0.0
        %994 = vmatprep.mubr.f32.mxu0 0.0
        %995 = vmatmul.mubr.f32.gmra.mxu0 %v928
        %v996 = vpop.f32.mrf.mxu0
        %v997 = vadd.f32 %v924, %v996
        %v998 = vpop.f32.mrf.mxu0
        %v999 = vadd.f32 %v924, %v998
        %1000 = vdwg.mxu0
        %1001 = vmatprep.subr.mxu0 0.0
        %1002 = vmatpush1.msra.mxu0 0.0
        %1003 = vmatprep.subr.mxu0 0.0
        %1004 = vmatpush1.msra.mxu0 0.0
        %1005 = vmatprep.subr.mxu0 0.0
        %1006 = vmatpush1.msra.mxu0 0.0
        %1007 = vmatprep.subr.mxu0 0.0
        %1008 = vmatpush1.msra.mxu0 0.0
        %1009 = vmatprep.subr.mxu0 0.0
        %1010 = vmatpush1.msra.mxu0 0.0
        %1011 = vmatprep.subr.mxu0 0.0
        %1012 = vmatpush1.msra.mxu0 0.0
        %1013 = vmatprep.subr.mxu0 0.0
        %1014 = vmatpush1.msra.mxu0 0.0
        %1015 = vmatprep.subr.mxu0 %v914
        %1016 = vmatpush1.msra.mxu0 %v913
        %1017 = vmatprep.subr.mxu0 %v838
        %1018 = vmatpush1.msra.mxu0 %v837
        %1019 = vmatprep.subr.mxu0 %v762
        %1020 = vmatpush1.msra.mxu0 %v761
        %1021 = vmatprep.subr.mxu0 %v686
        %1022 = vmatpush1.msra.mxu0 %v685
        %1023 = vmatprep.subr.mxu0 %v303
        %1024 = vmatpush1.msra.mxu0 %v302
        %1025 = vmatprep.subr.mxu0 %v610
        %1026 = vmatpush1.msra.mxu0 %v609
        %1027 = vmatprep.subr.mxu0 %v534
        %1028 = vmatpush1.msra.mxu0 %v533
        %1029 = vmatprep.subr.mxu0 %v458
        %1030 = vmatpush1.msra.mxu0 %v457
        %1031 = vmatprep.subr.mxu0 %v382
        %1032 = vmatpush1.msra.mxu0 %v381
        %1033 = vmatprep.subr.mxu0 0.0
        %1034 = vmatpush2.msra.mxu0 0.0
        %1035 = vmatprep.subr.mxu0 0.0
        %1036 = vmatpush2.msra.mxu0 0.0
        %1037 = vmatprep.subr.mxu0 0.0
        %1038 = vmatpush2.msra.mxu0 0.0
        %1039 = vmatprep.subr.mxu0 0.0
        %1040 = vmatpush2.msra.mxu0 0.0
        %1041 = vmatprep.subr.mxu0 0.0
        %1042 = vmatpush2.msra.mxu0 0.0
        %1043 = vmatprep.subr.mxu0 0.0
        %1044 = vmatpush2.msra.mxu0 0.0
        %1045 = vmatprep.subr.mxu0 0.0
        %1046 = vmatpush2.msra.mxu0 0.0
        %1047 = vmatprep.subr.mxu0 0.0
        %1048 = vmatpush2.msra.mxu0 0.0
        %1049 = vmatprep.subr.mxu0 0.0
        %1050 = vmatpush2.msra.mxu0 0.0
        %1051 = vmatprep.subr.mxu0 0.0
        %1052 = vmatpush2.msra.mxu0 0.0
        %1053 = vmatprep.subr.mxu0 0.0
        %1054 = vmatpush2.msra.mxu0 0.0
        %1055 = vmatprep.subr.mxu0 0.0
        %1056 = vmatpush2.msra.mxu0 0.0
        %1057 = vmatprep.subr.mxu0 0.0
        %1058 = vmatpush2.msra.mxu0 0.0
        %1059 = vmatprep.subr.mxu0 0.0
        %1060 = vmatpush2.msra.mxu0 0.0
        %1061 = vmatprep.subr.mxu0 0.0
        %1062 = vmatpush2.msra.mxu0 0.0
        %1063 = vmatprep.subr.mxu0 0.0
        %1064 = vmatpush2.msra.mxu0 0.0
        %1065 = vmatprep.mubr.f32.mxu0 0.0
        %1066 = vmatmul.mubr.f32.gmra.mxu0 %v928
        %v1067 = vpop.f32.mrf.mxu0
        %v1068 = vadd.f32 %v924, %v1067
        %v1069 = vpop.f32.mrf.mxu0
        %v1070 = vadd.f32 %v924, %v1069
        %1071 = vdwg.mxu0
        %1072 = vmatprep.subr.mxu0 0.0
        %1073 = vmatpush1.msra.mxu0 0.0
        %1074 = vmatprep.subr.mxu0 0.0
        %1075 = vmatpush1.msra.mxu0 0.0
        %1076 = vmatprep.subr.mxu0 0.0
        %1077 = vmatpush1.msra.mxu0 0.0
        %1078 = vmatprep.subr.mxu0 0.0
        %1079 = vmatpush1.msra.mxu0 0.0
        %1080 = vmatprep.subr.mxu0 0.0
        %1081 = vmatpush1.msra.mxu0 0.0
        %1082 = vmatprep.subr.mxu0 0.0
        %1083 = vmatpush1.msra.mxu0 0.0
        %1084 = vmatprep.subr.mxu0 0.0
        %1085 = vmatpush1.msra.mxu0 0.0
        %1086 = vmatprep.subr.mxu0 %v916
        %1087 = vmatpush1.msra.mxu0 %v915
        %1088 = vmatprep.subr.mxu0 %v840
        %1089 = vmatpush1.msra.mxu0 %v839
        %1090 = vmatprep.subr.mxu0 %v764
        %1091 = vmatpush1.msra.mxu0 %v763
        %1092 = vmatprep.subr.mxu0 %v688
        %1093 = vmatpush1.msra.mxu0 %v687
        %1094 = vmatprep.subr.mxu0 %v306
        %1095 = vmatpush1.msra.mxu0 %v305
        %1096 = vmatprep.subr.mxu0 %v612
        %1097 = vmatpush1.msra.mxu0 %v611
        %1098 = vmatprep.subr.mxu0 %v536
        %1099 = vmatpush1.msra.mxu0 %v535
        %1100 = vmatprep.subr.mxu0 %v460
        %1101 = vmatpush1.msra.mxu0 %v459
        %1102 = vmatprep.subr.mxu0 %v384
        %1103 = vmatpush1.msra.mxu0 %v383
        %1104 = vmatprep.subr.mxu0 0.0
        %1105 = vmatpush2.msra.mxu0 0.0
        %1106 = vmatprep.subr.mxu0 0.0
        %1107 = vmatpush2.msra.mxu0 0.0
        %1108 = vmatprep.subr.mxu0 0.0
        %1109 = vmatpush2.msra.mxu0 0.0
        %1110 = vmatprep.subr.mxu0 0.0
        %1111 = vmatpush2.msra.mxu0 0.0
        %1112 = vmatprep.subr.mxu0 0.0
        %1113 = vmatpush2.msra.mxu0 0.0
        %1114 = vmatprep.subr.mxu0 0.0
        %1115 = vmatpush2.msra.mxu0 0.0
        %1116 = vmatprep.subr.mxu0 0.0
        %1117 = vmatpush2.msra.mxu0 0.0
        %1118 = vmatprep.subr.mxu0 0.0
        %1119 = vmatpush2.msra.mxu0 0.0
        %1120 = vmatprep.subr.mxu0 0.0
        %1121 = vmatpush2.msra.mxu0 0.0
        %1122 = vmatprep.subr.mxu0 0.0
        %1123 = vmatpush2.msra.mxu0 0.0
        %1124 = vmatprep.subr.mxu0 0.0
        %1125 = vmatpush2.msra.mxu0 0.0
        %1126 = vmatprep.subr.mxu0 0.0
        %1127 = vmatpush2.msra.mxu0 0.0
        %1128 = vmatprep.subr.mxu0 0.0
        %1129 = vmatpush2.msra.mxu0 0.0
        %1130 = vmatprep.subr.mxu0 0.0
        %1131 = vmatpush2.msra.mxu0 0.0
        %1132 = vmatprep.subr.mxu0 0.0
        %1133 = vmatpush2.msra.mxu0 0.0
        %1134 = vmatprep.subr.mxu0 0.0
        %1135 = vmatpush2.msra.mxu0 0.0
        %1136 = vmatprep.mubr.f32.mxu0 0.0
        %1137 = vmatmul.mubr.f32.gmra.mxu0 %v928
        %v1138 = vpop.f32.mrf.mxu0
        %v1139 = vadd.f32 %v924, %v1138
        %v1140 = vpop.f32.mrf.mxu0
        %v1141 = vadd.f32 %v924, %v1140
        %1142 = vdwg.mxu0
        %1143 = vmatprep.subr.mxu0 0.0
        %1144 = vmatpush1.msra.mxu0 0.0
        %1145 = vmatprep.subr.mxu0 0.0
        %1146 = vmatpush1.msra.mxu0 0.0
        %1147 = vmatprep.subr.mxu0 0.0
        %1148 = vmatpush1.msra.mxu0 0.0
        %1149 = vmatprep.subr.mxu0 0.0
        %1150 = vmatpush1.msra.mxu0 0.0
        %1151 = vmatprep.subr.mxu0 0.0
        %1152 = vmatpush1.msra.mxu0 0.0
        %1153 = vmatprep.subr.mxu0 0.0
        %1154 = vmatpush1.msra.mxu0 0.0
        %1155 = vmatprep.subr.mxu0 0.0
        %1156 = vmatpush1.msra.mxu0 0.0
        %1157 = vmatprep.subr.mxu0 %v918
        %1158 = vmatpush1.msra.mxu0 %v917
        %1159 = vmatprep.subr.mxu0 %v842
        %1160 = vmatpush1.msra.mxu0 %v841
        %1161 = vmatprep.subr.mxu0 %v766
        %1162 = vmatpush1.msra.mxu0 %v765
        %1163 = vmatprep.subr.mxu0 %v690
        %1164 = vmatpush1.msra.mxu0 %v689
        %1165 = vmatprep.subr.mxu0 %v309
        %1166 = vmatpush1.msra.mxu0 %v308
        %1167 = vmatprep.subr.mxu0 %v614
        %1168 = vmatpush1.msra.mxu0 %v613
        %1169 = vmatprep.subr.mxu0 %v538
        %1170 = vmatpush1.msra.mxu0 %v537
        %1171 = vmatprep.subr.mxu0 %v462
        %1172 = vmatpush1.msra.mxu0 %v461
        %1173 = vmatprep.subr.mxu0 %v386
        %1174 = vmatpush1.msra.mxu0 %v385
        %1175 = vmatprep.subr.mxu0 0.0
        %1176 = vmatpush2.msra.mxu0 0.0
        %1177 = vmatprep.subr.mxu0 0.0
        %1178 = vmatpush2.msra.mxu0 0.0
        %1179 = vmatprep.subr.mxu0 0.0
        %1180 = vmatpush2.msra.mxu0 0.0
        %1181 = vmatprep.subr.mxu0 0.0
        %1182 = vmatpush2.msra.mxu0 0.0
        %1183 = vmatprep.subr.mxu0 0.0
        %1184 = vmatpush2.msra.mxu0 0.0
        %1185 = vmatprep.subr.mxu0 0.0
        %1186 = vmatpush2.msra.mxu0 0.0
        %1187 = vmatprep.subr.mxu0 0.0
        %1188 = vmatpush2.msra.mxu0 0.0
        %1189 = vmatprep.subr.mxu0 0.0
        %1190 = vmatpush2.msra.mxu0 0.0
        %1191 = vmatprep.subr.mxu0 0.0
        %1192 = vmatpush2.msra.mxu0 0.0
        %1193 = vmatprep.subr.mxu0 0.0
        %1194 = vmatpush2.msra.mxu0 0.0
        %1195 = vmatprep.subr.mxu0 0.0
        %1196 = vmatpush2.msra.mxu0 0.0
        %1197 = vmatprep.subr.mxu0 0.0
        %1198 = vmatpush2.msra.mxu0 0.0
        %1199 = vmatprep.subr.mxu0 0.0
        %1200 = vmatpush2.msra.mxu0 0.0
        %1201 = vmatprep.subr.mxu0 0.0
        %1202 = vmatpush2.msra.mxu0 0.0
        %1203 = vmatprep.subr.mxu0 0.0
        %1204 = vmatpush2.msra.mxu0 0.0
        %1205 = vmatprep.subr.mxu0 0.0
        %1206 = vmatpush2.msra.mxu0 0.0
        %1207 = vmatprep.mubr.f32.mxu0 0.0
        %1208 = vmatmul.mubr.f32.gmra.mxu0 %v928
        %v1209 = vpop.f32.mrf.mxu0
        %v1210 = vadd.f32 %v924, %v1209
        %v1211 = vpop.f32.mrf.mxu0
        %v1212 = vadd.f32 %v924, %v1211
        %1213 = vdwg.mxu0
        %v1214 = vmax.f32 %v997, 0.0
        %v1215 = vmax.f32 %v999, 0.0
        %v1216 = vmax.f32 %v1068, 0.0
        %v1217 = vmax.f32 %v1070, 0.0
        %v1218 = vmax.f32 %v1139, 0.0
        %v1219 = vmax.f32 %v1141, 0.0
        %v1220 = vmax.f32 %v1210, 0.0
        %v1221 = vmax.f32 %v1212, 0.0
        %1222 = vrot.lane.b32.xlu0 %v1214, 17
        %v1223 = vpop.permute.xlu0 %1222
        %1224 = vrot.lane.b32.xlu0 %v1215, 17
        %v1225 = vpop.permute.xlu0 %1224
        %1226 = vrot.lane.b32.xlu0 %v1216, 17
        %v1227 = vpop.permute.xlu0 %1226
        %1228 = vrot.lane.b32.xlu0 %v1217, 17
        %v1229 = vpop.permute.xlu0 %1228
        %1230 = vrot.lane.b32.xlu0 %v1218, 17
        %v1231 = vpop.permute.xlu0 %1230
        %1232 = vrot.lane.b32.xlu0 %v1219, 17
        %v1233 = vpop.permute.xlu0 %1232
        %1234 = vrot.lane.b32.xlu0 %v1220, 17
        %v1235 = vpop.permute.xlu0 %1234
        %1236 = vrot.lane.b32.xlu0 %v1221, 17
        %v1237 = vpop.permute.xlu0 %1236
        %v1238 = vsel %vm328, %v1235, %v1237
        %v1239 = vsel %vm328, %v1233, %v1235
        %v1240 = vsel %vm328, %v1231, %v1233
        %v1241 = vsel %vm328, %v1229, %v1231
        %v1242 = vsel %vm328, %v1227, %v1229
        %v1243 = vsel %vm328, %v1225, %v1227
        %v1244 = vsel %vm328, %v1223, %v1225
        %v1245 = vsel %vm328, %v1237, %v1223
        %v1246 = vmul.f32 %v1245, %v342
        %v1247 = vmul.f32 %v1244, %v346
        %v1248 = vmul.f32 %v1243, %v350
        %v1249 = vmul.f32 %v1242, %v354
        %v1250 = vmul.f32 %v1241, %v358
        %v1251 = vmul.f32 %v1240, %v362
        %v1252 = vmul.f32 %v1239, %v366
        %v1253 = vmul.f32 %v1238, %v370
        %1254 = vrot.lane.b32.xlu0 %v1214, 16
        %v1255 = vpop.permute.xlu0 %1254
        %1256 = vrot.lane.b32.xlu0 %v1215, 16
        %v1257 = vpop.permute.xlu0 %1256
        %1258 = vrot.lane.b32.xlu0 %v1216, 16
        %v1259 = vpop.permute.xlu0 %1258
        %1260 = vrot.lane.b32.xlu0 %v1217, 16
        %v1261 = vpop.permute.xlu0 %1260
        %1262 = vrot.lane.b32.xlu0 %v1218, 16
        %v1263 = vpop.permute.xlu0 %1262
        %1264 = vrot.lane.b32.xlu0 %v1219, 16
        %v1265 = vpop.permute.xlu0 %1264
        %1266 = vrot.lane.b32.xlu0 %v1220, 16
        %v1267 = vpop.permute.xlu0 %1266
        %1268 = vrot.lane.b32.xlu0 %v1221, 16
        %v1269 = vpop.permute.xlu0 %1268
        %v1270 = vsel %vm403, %v1267, %v1269
        %v1271 = vsel %vm403, %v1265, %v1267
        %v1272 = vsel %vm403, %v1263, %v1265
        %v1273 = vsel %vm403, %v1261, %v1263
        %v1274 = vsel %vm403, %v1259, %v1261
        %v1275 = vsel %vm403, %v1257, %v1259
        %v1276 = vsel %vm403, %v1255, %v1257
        %v1277 = vsel %vm403, %v1269, %v1255
        %v1278 = vmul.f32 %v1277, %v418
        %v1279 = vmul.f32 %v1276, %v422
        %v1280 = vmul.f32 %v1275, %v426
        %v1281 = vmul.f32 %v1274, %v430
        %v1282 = vmul.f32 %v1273, %v434
        %v1283 = vmul.f32 %v1272, %v438
        %v1284 = vmul.f32 %v1271, %v442
        %v1285 = vmul.f32 %v1270, %v446
        %1286 = vrot.lane.b32.xlu0 %v1214, 15
        %v1287 = vpop.permute.xlu0 %1286
        %1288 = vrot.lane.b32.xlu0 %v1215, 15
        %v1289 = vpop.permute.xlu0 %1288
        %1290 = vrot.lane.b32.xlu0 %v1216, 15
        %v1291 = vpop.permute.xlu0 %1290
        %1292 = vrot.lane.b32.xlu0 %v1217, 15
        %v1293 = vpop.permute.xlu0 %1292
        %1294 = vrot.lane.b32.xlu0 %v1218, 15
        %v1295 = vpop.permute.xlu0 %1294
        %1296 = vrot.lane.b32.xlu0 %v1219, 15
        %v1297 = vpop.permute.xlu0 %1296
        %1298 = vrot.lane.b32.xlu0 %v1220, 15
        %v1299 = vpop.permute.xlu0 %1298
        %1300 = vrot.lane.b32.xlu0 %v1221, 15
        %v1301 = vpop.permute.xlu0 %1300
        %v1302 = vsel %vm479, %v1299, %v1301
        %v1303 = vsel %vm479, %v1297, %v1299
        %v1304 = vsel %vm479, %v1295, %v1297
        %v1305 = vsel %vm479, %v1293, %v1295
        %v1306 = vsel %vm479, %v1291, %v1293
        %v1307 = vsel %vm479, %v1289, %v1291
        %v1308 = vsel %vm479, %v1287, %v1289
        %v1309 = vsel %vm479, %v1301, %v1287
        %v1310 = vmul.f32 %v1309, %v494
        %v1311 = vmul.f32 %v1308, %v498
        %v1312 = vmul.f32 %v1307, %v502
        %v1313 = vmul.f32 %v1306, %v506
        %v1314 = vmul.f32 %v1305, %v510
        %v1315 = vmul.f32 %v1304, %v514
        %v1316 = vmul.f32 %v1303, %v518
        %v1317 = vmul.f32 %v1302, %v522
        %1318 = vrot.lane.b32.xlu0 %v1214, 1
        %v1319 = vpop.permute.xlu0 %1318
        %1320 = vrot.lane.b32.xlu0 %v1215, 1
        %v1321 = vpop.permute.xlu0 %1320
        %1322 = vrot.lane.b32.xlu0 %v1216, 1
        %v1323 = vpop.permute.xlu0 %1322
        %1324 = vrot.lane.b32.xlu0 %v1217, 1
        %v1325 = vpop.permute.xlu0 %1324
        %1326 = vrot.lane.b32.xlu0 %v1218, 1
        %v1327 = vpop.permute.xlu0 %1326
        %1328 = vrot.lane.b32.xlu0 %v1219, 1
        %v1329 = vpop.permute.xlu0 %1328
        %1330 = vrot.lane.b32.xlu0 %v1220, 1
        %v1331 = vpop.permute.xlu0 %1330
        %1332 = vrot.lane.b32.xlu0 %v1221, 1
        %v1333 = vpop.permute.xlu0 %1332
        %v1334 = vsel %vm555, %v1331, %v1333
        %v1335 = vsel %vm555, %v1329, %v1331
        %v1336 = vsel %vm555, %v1327, %v1329
        %v1337 = vsel %vm555, %v1325, %v1327
        %v1338 = vsel %vm555, %v1323, %v1325
        %v1339 = vsel %vm555, %v1321, %v1323
        %v1340 = vsel %vm555, %v1319, %v1321
        %v1341 = vsel %vm555, %v1333, %v1319
        %v1342 = vmul.f32 %v1341, %v570
        %v1343 = vmul.f32 %v1340, %v574
        %v1344 = vmul.f32 %v1339, %v578
        %v1345 = vmul.f32 %v1338, %v582
        %v1346 = vmul.f32 %v1337, %v586
        %v1347 = vmul.f32 %v1336, %v590
        %v1348 = vmul.f32 %v1335, %v594
        %v1349 = vmul.f32 %v1334, %v598
        %1350 = vrot.lane.b32.xlu0 %v1214, 127
        %v1351 = vpop.permute.xlu0 %1350
        %1352 = vrot.lane.b32.xlu0 %v1215, 127
        %v1353 = vpop.permute.xlu0 %1352
        %1354 = vrot.lane.b32.xlu0 %v1216, 127
        %v1355 = vpop.permute.xlu0 %1354
        %1356 = vrot.lane.b32.xlu0 %v1217, 127
        %v1357 = vpop.permute.xlu0 %1356
        %1358 = vrot.lane.b32.xlu0 %v1218, 127
        %v1359 = vpop.permute.xlu0 %1358
        %1360 = vrot.lane.b32.xlu0 %v1219, 127
        %v1361 = vpop.permute.xlu0 %1360
        %1362 = vrot.lane.b32.xlu0 %v1220, 127
        %v1363 = vpop.permute.xlu0 %1362
        %1364 = vrot.lane.b32.xlu0 %v1221, 127
        %v1365 = vpop.permute.xlu0 %1364
        %v1366 = vsel %vm631, %v1363, %v1365
        %v1367 = vsel %vm631, %v1361, %v1363
        %v1368 = vsel %vm631, %v1359, %v1361
        %v1369 = vsel %vm631, %v1357, %v1359
        %v1370 = vsel %vm631, %v1355, %v1357
        %v1371 = vsel %vm631, %v1353, %v1355
        %v1372 = vsel %vm631, %v1351, %v1353
        %v1373 = vsel %vm631, %v1365, %v1351
        %v1374 = vmul.f32 %v1372, %v646
        %v1375 = vmul.f32 %v1371, %v650
        %v1376 = vmul.f32 %v1370, %v654
        %v1377 = vmul.f32 %v1369, %v658
        %v1378 = vmul.f32 %v1368, %v662
        %v1379 = vmul.f32 %v1367, %v666
        %v1380 = vmul.f32 %v1366, %v670
        %v1381 = vmul.f32 %v1373, %v674
        %1382 = vrot.lane.b32.xlu0 %v1214, 113
        %v1383 = vpop.permute.xlu0 %1382
        %1384 = vrot.lane.b32.xlu0 %v1215, 113
        %v1385 = vpop.permute.xlu0 %1384
        %1386 = vrot.lane.b32.xlu0 %v1216, 113
        %v1387 = vpop.permute.xlu0 %1386
        %1388 = vrot.lane.b32.xlu0 %v1217, 113
        %v1389 = vpop.permute.xlu0 %1388
        %1390 = vrot.lane.b32.xlu0 %v1218, 113
        %v1391 = vpop.permute.xlu0 %1390
        %1392 = vrot.lane.b32.xlu0 %v1219, 113
        %v1393 = vpop.permute.xlu0 %1392
        %1394 = vrot.lane.b32.xlu0 %v1220, 113
        %v1395 = vpop.permute.xlu0 %1394
        %1396 = vrot.lane.b32.xlu0 %v1221, 113
        %v1397 = vpop.permute.xlu0 %1396
        %v1398 = vsel %vm707, %v1395, %v1397
        %v1399 = vsel %vm707, %v1393, %v1395
        %v1400 = vsel %vm707, %v1391, %v1393
        %v1401 = vsel %vm707, %v1389, %v1391
        %v1402 = vsel %vm707, %v1387, %v1389
        %v1403 = vsel %vm707, %v1385, %v1387
        %v1404 = vsel %vm707, %v1383, %v1385
        %v1405 = vsel %vm707, %v1397, %v1383
        %v1406 = vmul.f32 %v1404, %v722
        %v1407 = vmul.f32 %v1403, %v726
        %v1408 = vmul.f32 %v1402, %v730
        %v1409 = vmul.f32 %v1401, %v734
        %v1410 = vmul.f32 %v1400, %v738
        %v1411 = vmul.f32 %v1399, %v742
        %v1412 = vmul.f32 %v1398, %v746
        %v1413 = vmul.f32 %v1405, %v750
        %1414 = vrot.lane.b32.xlu0 %v1214, 112
        %v1415 = vpop.permute.xlu0 %1414
        %1416 = vrot.lane.b32.xlu0 %v1215, 112
        %v1417 = vpop.permute.xlu0 %1416
        %1418 = vrot.lane.b32.xlu0 %v1216, 112
        %v1419 = vpop.permute.xlu0 %1418
        %1420 = vrot.lane.b32.xlu0 %v1217, 112
        %v1421 = vpop.permute.xlu0 %1420
        %1422 = vrot.lane.b32.xlu0 %v1218, 112
        %v1423 = vpop.permute.xlu0 %1422
        %1424 = vrot.lane.b32.xlu0 %v1219, 112
        %v1425 = vpop.permute.xlu0 %1424
        %1426 = vrot.lane.b32.xlu0 %v1220, 112
        %v1427 = vpop.permute.xlu0 %1426
        %1428 = vrot.lane.b32.xlu0 %v1221, 112
        %v1429 = vpop.permute.xlu0 %1428
        %v1430 = vsel %vm783, %v1427, %v1429
        %v1431 = vsel %vm783, %v1425, %v1427
        %v1432 = vsel %vm783, %v1423, %v1425
        %v1433 = vsel %vm783, %v1421, %v1423
        %v1434 = vsel %vm783, %v1419, %v1421
        %v1435 = vsel %vm783, %v1417, %v1419
        %v1436 = vsel %vm783, %v1415, %v1417
        %v1437 = vsel %vm783, %v1429, %v1415
        %v1438 = vmul.f32 %v1436, %v798
        %v1439 = vmul.f32 %v1435, %v802
        %v1440 = vmul.f32 %v1434, %v806
        %v1441 = vmul.f32 %v1433, %v810
        %v1442 = vmul.f32 %v1432, %v814
        %v1443 = vmul.f32 %v1431, %v818
        %v1444 = vmul.f32 %v1430, %v822
        %v1445 = vmul.f32 %v1437, %v826
        %1446 = vrot.lane.b32.xlu0 %v1214, 111
        %v1447 = vpop.permute.xlu0 %1446
        %1448 = vrot.lane.b32.xlu0 %v1215, 111
        %v1449 = vpop.permute.xlu0 %1448
        %1450 = vrot.lane.b32.xlu0 %v1216, 111
        %v1451 = vpop.permute.xlu0 %1450
        %1452 = vrot.lane.b32.xlu0 %v1217, 111
        %v1453 = vpop.permute.xlu0 %1452
        %1454 = vrot.lane.b32.xlu0 %v1218, 111
        %v1455 = vpop.permute.xlu0 %1454
        %1456 = vrot.lane.b32.xlu0 %v1219, 111
        %v1457 = vpop.permute.xlu0 %1456
        %1458 = vrot.lane.b32.xlu0 %v1220, 111
        %v1459 = vpop.permute.xlu0 %1458
        %1460 = vrot.lane.b32.xlu0 %v1221, 111
        %v1461 = vpop.permute.xlu0 %1460
        %v1462 = vsel %vm859, %v1459, %v1461
        %v1463 = vsel %vm859, %v1457, %v1459
        %v1464 = vsel %vm859, %v1455, %v1457
        %v1465 = vsel %vm859, %v1453, %v1455
        %v1466 = vsel %vm859, %v1451, %v1453
        %v1467 = vsel %vm859, %v1449, %v1451
        %v1468 = vsel %vm859, %v1447, %v1449
        %v1469 = vsel %vm859, %v1461, %v1447
        %v1470 = vmul.f32 %v1468, %v874
        %v1471 = vmul.f32 %v1467, %v878
        %v1472 = vmul.f32 %v1466, %v882
        %v1473 = vmul.f32 %v1465, %v886
        %v1474 = vmul.f32 %v1464, %v890
        %v1475 = vmul.f32 %v1463, %v894
        %v1476 = vmul.f32 %v1462, %v898
        %v1477 = vmul.f32 %v1469, %v902
        %v1478 = vld [vmem:[%s4] sm:$0xff]
        %v1479 = vld [vmem:[%s5] sm:$0xff]
        %1481 = vset.pattern.permute.xlu0 0
        %1482 = vperm.xlu0 %1481, %v1479
        %v1483 = vpop.permute.xlu0 %1482
        %v1486 = vsel %vm926, %v1478, 0
        %1488 = vmatprep.subr.mxu0 0.0
        %1489 = vmatpush1.msra.mxu0 0.0
        %1490 = vmatprep.subr.mxu0 0.0
        %1491 = vmatpush1.msra.mxu0 0.0
        %1492 = vmatprep.subr.mxu0 0.0
        %1493 = vmatpush1.msra.mxu0 0.0
        %1494 = vmatprep.subr.mxu0 0.0
        %1495 = vmatpush1.msra.mxu0 0.0
        %1496 = vmatprep.subr.mxu0 0.0
        %1497 = vmatpush1.msra.mxu0 0.0
        %1498 = vmatprep.subr.mxu0 0.0
        %1499 = vmatpush1.msra.mxu0 0.0
        %1500 = vmatprep.subr.mxu0 0.0
        %1501 = vmatpush1.msra.mxu0 0.0
        %1502 = vmatprep.subr.mxu0 %v1471
        %1503 = vmatpush1.msra.mxu0 %v1470
        %1504 = vmatprep.subr.mxu0 %v1439
        %1505 = vmatpush1.msra.mxu0 %v1438
        %1506 = vmatprep.subr.mxu0 %v1407
        %1507 = vmatpush1.msra.mxu0 %v1406
        %1508 = vmatprep.subr.mxu0 %v1375
        %1509 = vmatpush1.msra.mxu0 %v1374
        %1510 = vmatprep.subr.mxu0 %v1215
        %1511 = vmatpush1.msra.mxu0 %v1214
        %1512 = vmatprep.subr.mxu0 %v1343
        %1513 = vmatpush1.msra.mxu0 %v1342
        %1514 = vmatprep.subr.mxu0 %v1311
        %1515 = vmatpush1.msra.mxu0 %v1310
        %1516 = vmatprep.subr.mxu0 %v1279
        %1517 = vmatpush1.msra.mxu0 %v1278
        %1518 = vmatprep.subr.mxu0 %v1247
        %1519 = vmatpush1.msra.mxu0 %v1246
        %1520 = vmatprep.subr.mxu0 0.0
        %1521 = vmatpush2.msra.mxu0 0.0
        %1522 = vmatprep.subr.mxu0 0.0
        %1523 = vmatpush2.msra.mxu0 0.0
        %1524 = vmatprep.subr.mxu0 0.0
        %1525 = vmatpush2.msra.mxu0 0.0
        %1526 = vmatprep.subr.mxu0 0.0
        %1527 = vmatpush2.msra.mxu0 0.0
        %1528 = vmatprep.subr.mxu0 0.0
        %1529 = vmatpush2.msra.mxu0 0.0
        %1530 = vmatprep.subr.mxu0 0.0
        %1531 = vmatpush2.msra.mxu0 0.0
        %1532 = vmatprep.subr.mxu0 0.0
        %1533 = vmatpush2.msra.mxu0 0.0
        %1534 = vmatprep.subr.mxu0 0.0
        %1535 = vmatpush2.msra.mxu0 0.0
        %1536 = vmatprep.subr.mxu0 0.0
        %1537 = vmatpush2.msra.mxu0 0.0
        %1538 = vmatprep.subr.mxu0 0.0
        %1539 = vmatpush2.msra.mxu0 0.0
        %1540 = vmatprep.subr.mxu0 0.0
        %1541 = vmatpush2.msra.mxu0 0.0
        %1542 = vmatprep.subr.mxu0 0.0
        %1543 = vmatpush2.msra.mxu0 0.0
        %1544 = vmatprep.subr.mxu0 0.0
        %1545 = vmatpush2.msra.mxu0 0.0
        %1546 = vmatprep.subr.mxu0 0.0
        %1547 = vmatpush2.msra.mxu0 0.0
        %1548 = vmatprep.subr.mxu0 0.0
        %1549 = vmatpush2.msra.mxu0 0.0
        %1550 = vmatprep.subr.mxu0 0.0
        %1551 = vmatpush2.msra.mxu0 0.0
        %1552 = vmatprep.mubr.f32.mxu0 0.0
        %1553 = vmatmul.mubr.f32.gmra.mxu0 %v1486
        %v1554 = vpop.f32.mrf.mxu0
        %v1555 = vadd.f32 %v1483, %v1554
        %v1556 = vpop.f32.mrf.mxu0
        %v1557 = vadd.f32 %v1483, %v1556
        %1558 = vdwg.mxu0
        %1559 = vmatprep.subr.mxu0 0.0
        %1560 = vmatpush1.msra.mxu0 0.0
        %1561 = vmatprep.subr.mxu0 0.0
        %1562 = vmatpush1.msra.mxu0 0.0
        %1563 = vmatprep.subr.mxu0 0.0
        %1564 = vmatpush1.msra.mxu0 0.0
        %1565 = vmatprep.subr.mxu0 0.0
        %1566 = vmatpush1.msra.mxu0 0.0
        %1567 = vmatprep.subr.mxu0 0.0
        %1568 = vmatpush1.msra.mxu0 0.0
        %1569 = vmatprep.subr.mxu0 0.0
        %1570 = vmatpush1.msra.mxu0 0.0
        %1571 = vmatprep.subr.mxu0 0.0
        %1572 = vmatpush1.msra.mxu0 0.0
        %1573 = vmatprep.subr.mxu0 %v1473
        %1574 = vmatpush1.msra.mxu0 %v1472
        %1575 = vmatprep.subr.mxu0 %v1441
        %1576 = vmatpush1.msra.mxu0 %v1440
        %1577 = vmatprep.subr.mxu0 %v1409
        %1578 = vmatpush1.msra.mxu0 %v1408
        %1579 = vmatprep.subr.mxu0 %v1377
        %1580 = vmatpush1.msra.mxu0 %v1376
        %1581 = vmatprep.subr.mxu0 %v1217
        %1582 = vmatpush1.msra.mxu0 %v1216
        %1583 = vmatprep.subr.mxu0 %v1345
        %1584 = vmatpush1.msra.mxu0 %v1344
        %1585 = vmatprep.subr.mxu0 %v1313
        %1586 = vmatpush1.msra.mxu0 %v1312
        %1587 = vmatprep.subr.mxu0 %v1281
        %1588 = vmatpush1.msra.mxu0 %v1280
        %1589 = vmatprep.subr.mxu0 %v1249
        %1590 = vmatpush1.msra.mxu0 %v1248
        %1591 = vmatprep.subr.mxu0 0.0
        %1592 = vmatpush2.msra.mxu0 0.0
        %1593 = vmatprep.subr.mxu0 0.0
        %1594 = vmatpush2.msra.mxu0 0.0
        %1595 = vmatprep.subr.mxu0 0.0
        %1596 = vmatpush2.msra.mxu0 0.0
        %1597 = vmatprep.subr.mxu0 0.0
        %1598 = vmatpush2.msra.mxu0 0.0
        %1599 = vmatprep.subr.mxu0 0.0
        %1600 = vmatpush2.msra.mxu0 0.0
        %1601 = vmatprep.subr.mxu0 0.0
        %1602 = vmatpush2.msra.mxu0 0.0
        %1603 = vmatprep.subr.mxu0 0.0
        %1604 = vmatpush2.msra.mxu0 0.0
        %1605 = vmatprep.subr.mxu0 0.0
        %1606 = vmatpush2.msra.mxu0 0.0
        %1607 = vmatprep.subr.mxu0 0.0
        %1608 = vmatpush2.msra.mxu0 0.0
        %1609 = vmatprep.subr.mxu0 0.0
        %1610 = vmatpush2.msra.mxu0 0.0
        %1611 = vmatprep.subr.mxu0 0.0
        %1612 = vmatpush2.msra.mxu0 0.0
        %1613 = vmatprep.subr.mxu0 0.0
        %1614 = vmatpush2.msra.mxu0 0.0
        %1615 = vmatprep.subr.mxu0 0.0
        %1616 = vmatpush2.msra.mxu0 0.0
        %1617 = vmatprep.subr.mxu0 0.0
        %1618 = vmatpush2.msra.mxu0 0.0
        %1619 = vmatprep.subr.mxu0 0.0
        %1620 = vmatpush2.msra.mxu0 0.0
        %1621 = vmatprep.subr.mxu0 0.0
        %1622 = vmatpush2.msra.mxu0 0.0
        %1623 = vmatprep.mubr.f32.mxu0 0.0
        %1624 = vmatmul.mubr.f32.gmra.mxu0 %v1486
        %v1625 = vpop.f32.mrf.mxu0
        %v1626 = vadd.f32 %v1483, %v1625
        %v1627 = vpop.f32.mrf.mxu0
        %v1628 = vadd.f32 %v1483, %v1627
        %1629 = vdwg.mxu0
        %1630 = vmatprep.subr.mxu0 0.0
        %1631 = vmatpush1.msra.mxu0 0.0
        %1632 = vmatprep.subr.mxu0 0.0
        %1633 = vmatpush1.msra.mxu0 0.0
        %1634 = vmatprep.subr.mxu0 0.0
        %1635 = vmatpush1.msra.mxu0 0.0
        %1636 = vmatprep.subr.mxu0 0.0
        %1637 = vmatpush1.msra.mxu0 0.0
        %1638 = vmatprep.subr.mxu0 0.0
        %1639 = vmatpush1.msra.mxu0 0.0
        %1640 = vmatprep.subr.mxu0 0.0
        %1641 = vmatpush1.msra.mxu0 0.0
        %1642 = vmatprep.subr.mxu0 0.0
        %1643 = vmatpush1.msra.mxu0 0.0
        %1644 = vmatprep.subr.mxu0 %v1475
        %1645 = vmatpush1.msra.mxu0 %v1474
        %1646 = vmatprep.subr.mxu0 %v1443
        %1647 = vmatpush1.msra.mxu0 %v1442
        %1648 = vmatprep.subr.mxu0 %v1411
        %1649 = vmatpush1.msra.mxu0 %v1410
        %1650 = vmatprep.subr.mxu0 %v1379
        %1651 = vmatpush1.msra.mxu0 %v1378
        %1652 = vmatprep.subr.mxu0 %v1219
        %1653 = vmatpush1.msra.mxu0 %v1218
        %1654 = vmatprep.subr.mxu0 %v1347
        %1655 = vmatpush1.msra.mxu0 %v1346
        %1656 = vmatprep.subr.mxu0 %v1315
        %1657 = vmatpush1.msra.mxu0 %v1314
        %1658 = vmatprep.subr.mxu0 %v1283
        %1659 = vmatpush1.msra.mxu0 %v1282
        %1660 = vmatprep.subr.mxu0 %v1251
        %1661 = vmatpush1.msra.mxu0 %v1250
        %1662 = vmatprep.subr.mxu0 0.0
        %1663 = vmatpush2.msra.mxu0 0.0
        %1664 = vmatprep.subr.mxu0 0.0
        %1665 = vmatpush2.msra.mxu0 0.0
        %1666 = vmatprep.subr.mxu0 0.0
        %1667 = vmatpush2.msra.mxu0 0.0
        %1668 = vmatprep.subr.mxu0 0.0
        %1669 = vmatpush2.msra.mxu0 0.0
        %1670 = vmatprep.subr.mxu0 0.0
        %1671 = vmatpush2.msra.mxu0 0.0
        %1672 = vmatprep.subr.mxu0 0.0
        %1673 = vmatpush2.msra.mxu0 0.0
        %1674 = vmatprep.subr.mxu0 0.0
        %1675 = vmatpush2.msra.mxu0 0.0
        %1676 = vmatprep.subr.mxu0 0.0
        %1677 = vmatpush2.msra.mxu0 0.0
        %1678 = vmatprep.subr.mxu0 0.0
        %1679 = vmatpush2.msra.mxu0 0.0
        %1680 = vmatprep.subr.mxu0 0.0
        %1681 = vmatpush2.msra.mxu0 0.0
        %1682 = vmatprep.subr.mxu0 0.0
        %1683 = vmatpush2.msra.mxu0 0.0
        %1684 = vmatprep.subr.mxu0 0.0
        %1685 = vmatpush2.msra.mxu0 0.0
        %1686 = vmatprep.subr.mxu0 0.0
        %1687 = vmatpush2.msra.mxu0 0.0
        %1688 = vmatprep.subr.mxu0 0.0
        %1689 = vmatpush2.msra.mxu0 0.0
        %1690 = vmatprep.subr.mxu0 0.0
        %1691 = vmatpush2.msra.mxu0 0.0
        %1692 = vmatprep.subr.mxu0 0.0
        %1693 = vmatpush2.msra.mxu0 0.0
        %1694 = vmatprep.mubr.f32.mxu0 0.0
        %1695 = vmatmul.mubr.f32.gmra.mxu0 %v1486
        %v1696 = vpop.f32.mrf.mxu0
        %v1697 = vadd.f32 %v1483, %v1696
        %v1698 = vpop.f32.mrf.mxu0
        %v1699 = vadd.f32 %v1483, %v1698
        %1700 = vdwg.mxu0
        %1701 = vmatprep.subr.mxu0 0.0
        %1702 = vmatpush1.msra.mxu0 0.0
        %1703 = vmatprep.subr.mxu0 0.0
        %1704 = vmatpush1.msra.mxu0 0.0
        %1705 = vmatprep.subr.mxu0 0.0
        %1706 = vmatpush1.msra.mxu0 0.0
        %1707 = vmatprep.subr.mxu0 0.0
        %1708 = vmatpush1.msra.mxu0 0.0
        %1709 = vmatprep.subr.mxu0 0.0
        %1710 = vmatpush1.msra.mxu0 0.0
        %1711 = vmatprep.subr.mxu0 0.0
        %1712 = vmatpush1.msra.mxu0 0.0
        %1713 = vmatprep.subr.mxu0 0.0
        %1714 = vmatpush1.msra.mxu0 0.0
        %1715 = vmatprep.subr.mxu0 %v1477
        %1716 = vmatpush1.msra.mxu0 %v1476
        %1717 = vmatprep.subr.mxu0 %v1445
        %1718 = vmatpush1.msra.mxu0 %v1444
        %1719 = vmatprep.subr.mxu0 %v1413
        %1720 = vmatpush1.msra.mxu0 %v1412
        %1721 = vmatprep.subr.mxu0 %v1381
        %1722 = vmatpush1.msra.mxu0 %v1380
        %1723 = vmatprep.subr.mxu0 %v1221
        %1724 = vmatpush1.msra.mxu0 %v1220
        %1725 = vmatprep.subr.mxu0 %v1349
        %1726 = vmatpush1.msra.mxu0 %v1348
        %1727 = vmatprep.subr.mxu0 %v1317
        %1728 = vmatpush1.msra.mxu0 %v1316
        %1729 = vmatprep.subr.mxu0 %v1285
        %1730 = vmatpush1.msra.mxu0 %v1284
        %1731 = vmatprep.subr.mxu0 %v1253
        %1732 = vmatpush1.msra.mxu0 %v1252
        %1733 = vmatprep.subr.mxu0 0.0
        %1734 = vmatpush2.msra.mxu0 0.0
        %1735 = vmatprep.subr.mxu0 0.0
        %1736 = vmatpush2.msra.mxu0 0.0
        %1737 = vmatprep.subr.mxu0 0.0
        %1738 = vmatpush2.msra.mxu0 0.0
        %1739 = vmatprep.subr.mxu0 0.0
        %1740 = vmatpush2.msra.mxu0 0.0
        %1741 = vmatprep.subr.mxu0 0.0
        %1742 = vmatpush2.msra.mxu0 0.0
        %1743 = vmatprep.subr.mxu0 0.0
        %1744 = vmatpush2.msra.mxu0 0.0
        %1745 = vmatprep.subr.mxu0 0.0
        %1746 = vmatpush2.msra.mxu0 0.0
        %1747 = vmatprep.subr.mxu0 0.0
        %1748 = vmatpush2.msra.mxu0 0.0
        %1749 = vmatprep.subr.mxu0 0.0
        %1750 = vmatpush2.msra.mxu0 0.0
        %1751 = vmatprep.subr.mxu0 0.0
        %1752 = vmatpush2.msra.mxu0 0.0
        %1753 = vmatprep.subr.mxu0 0.0
        %1754 = vmatpush2.msra.mxu0 0.0
        %1755 = vmatprep.subr.mxu0 0.0
        %1756 = vmatpush2.msra.mxu0 0.0
        %1757 = vmatprep.subr.mxu0 0.0
        %1758 = vmatpush2.msra.mxu0 0.0
        %1759 = vmatprep.subr.mxu0 0.0
        %1760 = vmatpush2.msra.mxu0 0.0
        %1761 = vmatprep.subr.mxu0 0.0
        %1762 = vmatpush2.msra.mxu0 0.0
        %1763 = vmatprep.subr.mxu0 0.0
        %1764 = vmatpush2.msra.mxu0 0.0
        %1765 = vmatprep.mubr.f32.mxu0 0.0
        %1766 = vmatmul.mubr.f32.gmra.mxu0 %v1486
        %v1767 = vpop.f32.mrf.mxu0
        %v1768 = vadd.f32 %v1483, %v1767
        %v1769 = vpop.f32.mrf.mxu0
        %v1770 = vadd.f32 %v1483, %v1769
        %1771 = vdwg.mxu0
        %v1772 = vmax.f32 %v1555, 0.0
        %v1773 = vmax.f32 %v1557, 0.0
        %v1774 = vmax.f32 %v1626, 0.0
        %v1775 = vmax.f32 %v1628, 0.0
        %v1776 = vmax.f32 %v1697, 0.0
        %v1777 = vmax.f32 %v1699, 0.0
        %v1778 = vmax.f32 %v1768, 0.0
        %v1779 = vmax.f32 %v1770, 0.0
        %1780 = vrot.lane.b32.xlu0 %v1772, 127
        %v1781 = vpop.permute.xlu0 %1780
        %1782 = vrot.lane.b32.xlu0 %v1773, 127
        %v1783 = vpop.permute.xlu0 %1782
        %1784 = vrot.lane.b32.xlu0 %v1774, 127
        %v1785 = vpop.permute.xlu0 %1784
        %1786 = vrot.lane.b32.xlu0 %v1775, 127
        %v1787 = vpop.permute.xlu0 %1786
        %1788 = vrot.lane.b32.xlu0 %v1776, 127
        %v1789 = vpop.permute.xlu0 %1788
        %1790 = vrot.lane.b32.xlu0 %v1777, 127
        %v1791 = vpop.permute.xlu0 %1790
        %1792 = vrot.lane.b32.xlu0 %v1778, 127
        %v1793 = vpop.permute.xlu0 %1792
        %1794 = vrot.lane.b32.xlu0 %v1779, 127
        %v1795 = vpop.permute.xlu0 %1794
        %v1796 = vsel %vm631, %v1793, %v1795
        %v1797 = vsel %vm631, %v1791, %v1793
        %v1798 = vsel %vm631, %v1789, %v1791
        %v1799 = vsel %vm631, %v1787, %v1789
        %v1800 = vsel %vm631, %v1785, %v1787
        %v1801 = vsel %vm631, %v1783, %v1785
        %v1802 = vsel %vm631, %v1781, %v1783
        %v1803 = vsel %vm631, %v1795, %v1781
        %v1804 = vadd.f32 %v1772, %v1802
        %v1805 = vadd.f32 %v1773, %v1801
        %v1806 = vadd.f32 %v1774, %v1800
        %v1807 = vadd.f32 %v1775, %v1799
        %v1808 = vadd.f32 %v1776, %v1798
        %v1809 = vadd.f32 %v1777, %v1797
        %v1810 = vadd.f32 %v1778, %v1796
        %v1811 = vadd.f32 %v1779, %v1803
        %1812 = vrot.lane.b32.xlu0 %v1772, 112
        %v1813 = vpop.permute.xlu0 %1812
        %1814 = vrot.lane.b32.xlu0 %v1773, 112
        %v1815 = vpop.permute.xlu0 %1814
        %1816 = vrot.lane.b32.xlu0 %v1774, 112
        %v1817 = vpop.permute.xlu0 %1816
        %1818 = vrot.lane.b32.xlu0 %v1775, 112
        %v1819 = vpop.permute.xlu0 %1818
        %1820 = vrot.lane.b32.xlu0 %v1776, 112
        %v1821 = vpop.permute.xlu0 %1820
        %1822 = vrot.lane.b32.xlu0 %v1777, 112
        %v1823 = vpop.permute.xlu0 %1822
        %1824 = vrot.lane.b32.xlu0 %v1778, 112
        %v1825 = vpop.permute.xlu0 %1824
        %1826 = vrot.lane.b32.xlu0 %v1779, 112
        %v1827 = vpop.permute.xlu0 %1826
        %v1828 = vsel %vm783, %v1825, %v1827
        %v1829 = vsel %vm783, %v1823, %v1825
        %v1830 = vsel %vm783, %v1821, %v1823
        %v1831 = vsel %vm783, %v1819, %v1821
        %v1832 = vsel %vm783, %v1817, %v1819
        %v1833 = vsel %vm783, %v1815, %v1817
        %v1834 = vsel %vm783, %v1813, %v1815
        %v1835 = vsel %vm783, %v1827, %v1813
        %v1836 = vadd.f32 %v1804, %v1834
        %v1837 = vadd.f32 %v1805, %v1833
        %v1838 = vadd.f32 %v1806, %v1832
        %v1839 = vadd.f32 %v1807, %v1831
        %v1840 = vadd.f32 %v1808, %v1830
        %v1841 = vadd.f32 %v1809, %v1829
        %v1842 = vadd.f32 %v1810, %v1828
        %v1843 = vadd.f32 %v1811, %v1835
        %1844 = vrot.lane.b32.xlu0 %v1772, 111
        %v1845 = vpop.permute.xlu0 %1844
        %1846 = vrot.lane.b32.xlu0 %v1773, 111
        %v1847 = vpop.permute.xlu0 %1846
        %1848 = vrot.lane.b32.xlu0 %v1774, 111
        %v1849 = vpop.permute.xlu0 %1848
        %1850 = vrot.lane.b32.xlu0 %v1775, 111
        %v1851 = vpop.permute.xlu0 %1850
        %1852 = vrot.lane.b32.xlu0 %v1776, 111
        %v1853 = vpop.permute.xlu0 %1852
        %1854 = vrot.lane.b32.xlu0 %v1777, 111
        %v1855 = vpop.permute.xlu0 %1854
        %1856 = vrot.lane.b32.xlu0 %v1778, 111
        %v1857 = vpop.permute.xlu0 %1856
        %1858 = vrot.lane.b32.xlu0 %v1779, 111
        %v1859 = vpop.permute.xlu0 %1858
        %v1860 = vsel %vm859, %v1857, %v1859
        %v1861 = vsel %vm859, %v1855, %v1857
        %v1862 = vsel %vm859, %v1853, %v1855
        %v1863 = vsel %vm859, %v1851, %v1853
        %v1864 = vsel %vm859, %v1849, %v1851
        %v1865 = vsel %vm859, %v1847, %v1849
        %v1866 = vsel %vm859, %v1845, %v1847
        %v1867 = vsel %vm859, %v1859, %v1845
        %v1868 = vadd.f32 %v1836, %v1866
        %v1869 = vadd.f32 %v1837, %v1865
        %v1870 = vadd.f32 %v1838, %v1864
        %v1871 = vadd.f32 %v1839, %v1863
        %v1872 = vadd.f32 %v1840, %v1862
        %v1873 = vadd.f32 %v1841, %v1861
        %v1874 = vadd.f32 %v1842, %v1860
        %v1875 = vadd.f32 %v1843, %v1867
        %v1876 = vmul.f32 %v1868, 0.25
        %v1877 = vmul.f32 %v1869, 0.25
        %v1878 = vmul.f32 %v1870, 0.25
        %v1879 = vmul.f32 %v1871, 0.25
        %v1880 = vmul.f32 %v1872, 0.25
        %v1881 = vmul.f32 %v1873, 0.25
        %v1882 = vmul.f32 %v1874, 0.25
        %v1883 = vmul.f32 %v1875, 0.25
        %v1884 = vld [vmem:[#allocation2] sm:$0xff]
        %v1885 = vld [vmem:[#allocation2 + $0x8] sm:$0xff]
        %v1886 = vld [vmem:[#allocation2 + $0x10] sm:$0xff]
        %v1887 = vld [vmem:[#allocation2 + $0x18] sm:$0xff]
        %v1888 = vld [vmem:[#allocation2 + $0x20] sm:$0xff]
        %v1889 = vld [vmem:[#allocation2 + $0x28] sm:$0xff]
        %v1890 = vld [vmem:[#allocation2 + $0x30] sm:$0xff]
        %v1891 = vld [vmem:[#allocation2 + $0x38] sm:$0xff]
        %v1892 = vld [vmem:[#allocation2 + $0x40] sm:$0xff]
        %v1893 = vld [vmem:[#allocation2 + $0x48] sm:$0xff]
        %v1894 = vld [vmem:[#allocation2 + $0x50] sm:$0xff]
        %v1895 = vld [vmem:[#allocation2 + $0x58] sm:$0xff]
        %v1896 = vld [vmem:[#allocation2 + $0x60] sm:$0xff]
        %v1897 = vld [vmem:[#allocation2 + $0x68] sm:$0xff]
        %v1898 = vld [vmem:[#allocation2 + $0x70] sm:$0xff]
        %v1899 = vld [vmem:[#allocation2 + $0x78] sm:$0xff]
        %v1900 = vld [vmem:[#allocation2 + $0x80] sm:$0xff]
        %v1901 = vld [vmem:[#allocation2 + $0x88] sm:$0xff]
        %v1902 = vld [vmem:[#allocation2 + $0x90] sm:$0xff]
        %v1903 = vld [vmem:[#allocation2 + $0x98] sm:$0xff]
        %v1904 = vld [vmem:[#allocation2 + $0xa0] sm:$0xff]
        %v1905 = vld [vmem:[#allocation2 + $0xa8] sm:$0xff]
        %v1906 = vld [vmem:[#allocation2 + $0xb0] sm:$0xff]
        %v1907 = vld [vmem:[#allocation2 + $0xb8] sm:$0xff]
        %v1908 = vld [vmem:[#allocation2 + $0xc0] sm:$0xff]
        %v1909 = vld [vmem:[#allocation2 + $0xc8] sm:$0xff]
        %v1910 = vld [vmem:[#allocation2 + $0xd0] sm:$0xff]
        %v1911 = vld [vmem:[#allocation2 + $0xd8] sm:$0xff]
        %v1912 = vld [vmem:[#allocation2 + $0xe0] sm:$0xff]
        %v1913 = vld [vmem:[#allocation2 + $0xe8] sm:$0xff]
        %v1914 = vld [vmem:[#allocation2 + $0xf0] sm:$0xff]
        %v1915 = vld [vmem:[#allocation2 + $0xf8] sm:$0xff]
        %v1916 = vld [vmem:[#allocation2 + $0x100] sm:$0xff]
        %v1917 = vld [vmem:[#allocation2 + $0x108] sm:$0xff]
        %v1918 = vld [vmem:[#allocation2 + $0x110] sm:$0xff]
        %v1919 = vld [vmem:[#allocation2 + $0x118] sm:$0xff]
        %v1920 = vld [vmem:[#allocation2 + $0x120] sm:$0xff]
        %v1921 = vld [vmem:[#allocation2 + $0x128] sm:$0xff]
        %v1922 = vld [vmem:[#allocation2 + $0x130] sm:$0xff]
        %v1923 = vld [vmem:[#allocation2 + $0x138] sm:$0xff]
        %v1924 = vld [vmem:[#allocation2 + $0x140] sm:$0xff]
        %v1925 = vld [vmem:[#allocation2 + $0x148] sm:$0xff]
        %v1926 = vld [vmem:[#allocation2 + $0x150] sm:$0xff]
        %v1927 = vld [vmem:[#allocation2 + $0x158] sm:$0xff]
        %v1928 = vld [vmem:[#allocation2 + $0x160] sm:$0xff]
        %v1929 = vld [vmem:[#allocation2 + $0x168] sm:$0xff]
        %v1930 = vld [vmem:[#allocation2 + $0x170] sm:$0xff]
        %v1931 = vld [vmem:[#allocation2 + $0x178] sm:$0xff]
        %v1932 = vld [vmem:[#allocation2 + $0x180] sm:$0xff]
        %v1933 = vld [vmem:[#allocation2 + $0x188] sm:$0xff]
        %v1934 = vld [vmem:[#allocation2 + $0x190] sm:$0xff]
        %v1935 = vld [vmem:[#allocation2 + $0x198] sm:$0xff]
        %v1936 = vld [vmem:[#allocation2 + $0x1a0] sm:$0xff]
        %v1937 = vld [vmem:[#allocation2 + $0x1a8] sm:$0xff]
        %v1938 = vld [vmem:[#allocation2 + $0x1b0] sm:$0xff]
        %v1939 = vld [vmem:[#allocation2 + $0x1b8] sm:$0xff]
        %v1940 = vld [vmem:[#allocation2 + $0x1c0] sm:$0xff]
        %v1941 = vld [vmem:[#allocation2 + $0x1c8] sm:$0xff]
        %v1942 = vld [vmem:[#allocation2 + $0x1d0] sm:$0xff]
        %v1943 = vld [vmem:[#allocation2 + $0x1d8] sm:$0xff]
        %v1944 = vld [vmem:[#allocation2 + $0x1e0] sm:$0xff]
        %v1945 = vld [vmem:[#allocation2 + $0x1e8] sm:$0xff]
        %v1946 = vld [vmem:[#allocation2 + $0x1f0] sm:$0xff]
        %v1947 = vld [vmem:[#allocation2 + $0x1f8] sm:$0xff]
        %v1948 = vld [vmem:[#allocation2 + $0x200] sm:$0xff]
        %v1949 = vld [vmem:[#allocation2 + $0x208] sm:$0xff]
        %v1950 = vld [vmem:[#allocation2 + $0x210] sm:$0xff]
        %v1951 = vld [vmem:[#allocation2 + $0x218] sm:$0xff]
        %v1952 = vld [vmem:[#allocation2 + $0x220] sm:$0xff]
        %v1953 = vld [vmem:[#allocation2 + $0x228] sm:$0xff]
        %v1954 = vld [vmem:[#allocation2 + $0x230] sm:$0xff]
        %v1955 = vld [vmem:[#allocation2 + $0x238] sm:$0xff]
        %v1956 = vld [vmem:[#allocation2 + $0x240] sm:$0xff]
        %v1957 = vld [vmem:[#allocation2 + $0x248] sm:$0xff]
        %v1958 = vld [vmem:[#allocation2 + $0x250] sm:$0xff]
        %v1959 = vld [vmem:[#allocation2 + $0x258] sm:$0xff]
        %v1960 = vld [vmem:[#allocation2 + $0x260] sm:$0xff]
        %v1961 = vld [vmem:[#allocation2 + $0x268] sm:$0xff]
        %v1962 = vld [vmem:[#allocation2 + $0x270] sm:$0xff]
        %v1963 = vld [vmem:[#allocation2 + $0x278] sm:$0xff]
        %v1964 = vld [vmem:[#allocation2 + $0x280] sm:$0xff]
        %v1965 = vld [vmem:[#allocation2 + $0x288] sm:$0xff]
        %v1966 = vld [vmem:[#allocation2 + $0x290] sm:$0xff]
        %v1967 = vld [vmem:[#allocation2 + $0x298] sm:$0xff]
        %v1968 = vld [vmem:[#allocation2 + $0x2a0] sm:$0xff]
        %v1969 = vld [vmem:[#allocation2 + $0x2a8] sm:$0xff]
        %v1970 = vld [vmem:[#allocation2 + $0x2b0] sm:$0xff]
        %v1971 = vld [vmem:[#allocation2 + $0x2b8] sm:$0xff]
        %v1972 = vld [vmem:[#allocation2 + $0x2c0] sm:$0xff]
        %v1973 = vld [vmem:[#allocation2 + $0x2c8] sm:$0xff]
        %v1974 = vld [vmem:[#allocation2 + $0x2d0] sm:$0xff]
        %v1975 = vld [vmem:[#allocation2 + $0x2d8] sm:$0xff]
        %v1976 = vld [vmem:[#allocation2 + $0x2e0] sm:$0xff]
        %v1977 = vld [vmem:[#allocation2 + $0x2e8] sm:$0xff]
        %v1978 = vld [vmem:[#allocation2 + $0x2f0] sm:$0xff]
        %v1979 = vld [vmem:[#allocation2 + $0x2f8] sm:$0xff]
        %v1980 = vld [vmem:[#allocation2 + $0x300] sm:$0xff]
        %v1981 = vld [vmem:[#allocation2 + $0x308] sm:$0xff]
        %v1982 = vld [vmem:[#allocation2 + $0x310] sm:$0xff]
        %v1983 = vld [vmem:[#allocation2 + $0x318] sm:$0xff]
        %v1984 = vld [vmem:[#allocation2 + $0x320] sm:$0xff]
        %v1985 = vld [vmem:[#allocation2 + $0x328] sm:$0xff]
        %v1986 = vld [vmem:[#allocation2 + $0x330] sm:$0xff]
        %v1987 = vld [vmem:[#allocation2 + $0x338] sm:$0xff]
        %v1988 = vld [vmem:[#allocation2 + $0x340] sm:$0xff]
        %v1989 = vld [vmem:[#allocation2 + $0x348] sm:$0xff]
        %v1990 = vld [vmem:[#allocation2 + $0x350] sm:$0xff]
        %v1991 = vld [vmem:[#allocation2 + $0x358] sm:$0xff]
        %v1992 = vld [vmem:[#allocation2 + $0x360] sm:$0xff]
        %v1993 = vld [vmem:[#allocation2 + $0x368] sm:$0xff]
        %v1994 = vld [vmem:[#allocation2 + $0x370] sm:$0xff]
        %v1995 = vld [vmem:[#allocation2 + $0x378] sm:$0xff]
        %v1996 = vld [vmem:[#allocation2 + $0x380] sm:$0xff]
        %v1997 = vld [vmem:[#allocation2 + $0x388] sm:$0xff]
        %v1998 = vld [vmem:[#allocation2 + $0x390] sm:$0xff]
        %v1999 = vld [vmem:[#allocation2 + $0x398] sm:$0xff]
        %v2000 = vld [vmem:[#allocation2 + $0x3a0] sm:$0xff]
        %v2001 = vld [vmem:[#allocation2 + $0x3a8] sm:$0xff]
        %v2002 = vld [vmem:[#allocation2 + $0x3b0] sm:$0xff]
        %v2003 = vld [vmem:[#allocation2 + $0x3b8] sm:$0xff]
        %v2004 = vld [vmem:[#allocation2 + $0x3c0] sm:$0xff]
        %v2005 = vld [vmem:[#allocation2 + $0x3c8] sm:$0xff]
        %v2006 = vld [vmem:[#allocation2 + $0x3d0] sm:$0xff]
        %v2007 = vld [vmem:[#allocation2 + $0x3d8] sm:$0xff]
        %v2008 = vld [vmem:[#allocation2 + $0x3e0] sm:$0xff]
        %v2009 = vld [vmem:[#allocation2 + $0x3e8] sm:$0xff]
        %v2010 = vld [vmem:[#allocation2 + $0x3f0] sm:$0xff]
        %v2011 = vld [vmem:[#allocation2 + $0x3f8] sm:$0xff]
        %v2012 = vld [vmem:[#allocation2 + $0x400] sm:$0xff]
        %v2013 = vld [vmem:[#allocation2 + $0x408] sm:$0xff]
        %v2014 = vld [vmem:[#allocation2 + $0x410] sm:$0xff]
        %v2015 = vld [vmem:[#allocation2 + $0x418] sm:$0xff]
        %v2016 = vld [vmem:[#allocation2 + $0x420] sm:$0xff]
        %v2017 = vld [vmem:[#allocation2 + $0x428] sm:$0xff]
        %v2018 = vld [vmem:[#allocation2 + $0x430] sm:$0xff]
        %v2019 = vld [vmem:[#allocation2 + $0x438] sm:$0xff]
        %v2020 = vld [vmem:[#allocation2 + $0x440] sm:$0xff]
        %v2021 = vld [vmem:[#allocation2 + $0x448] sm:$0xff]
        %v2022 = vld [vmem:[#allocation2 + $0x450] sm:$0xff]
        %v2023 = vld [vmem:[#allocation2 + $0x458] sm:$0xff]
        %v2024 = vld [vmem:[#allocation2 + $0x460] sm:$0xff]
        %v2025 = vld [vmem:[#allocation2 + $0x468] sm:$0xff]
        %v2026 = vld [vmem:[#allocation2 + $0x470] sm:$0xff]
        %v2027 = vld [vmem:[#allocation2 + $0x478] sm:$0xff]
        %v2028 = vld [vmem:[#allocation2 + $0x480] sm:$0xff]
        %v2029 = vld [vmem:[#allocation2 + $0x488] sm:$0xff]
        %v2030 = vld [vmem:[#allocation2 + $0x490] sm:$0xff]
        %v2031 = vld [vmem:[#allocation2 + $0x498] sm:$0xff]
        %v2032 = vld [vmem:[#allocation2 + $0x4a0] sm:$0xff]
        %v2033 = vld [vmem:[#allocation2 + $0x4a8] sm:$0xff]
        %v2034 = vld [vmem:[#allocation2 + $0x4b0] sm:$0xff]
        %v2035 = vld [vmem:[#allocation2 + $0x4b8] sm:$0xff]
        %v2036 = vld [vmem:[#allocation2 + $0x4c0] sm:$0xff]
        %v2037 = vld [vmem:[#allocation2 + $0x4c8] sm:$0xff]
        %v2038 = vld [vmem:[#allocation2 + $0x4d0] sm:$0xff]
        %v2039 = vld [vmem:[#allocation2 + $0x4d8] sm:$0xff]
        %v2040 = vld [vmem:[#allocation2 + $0x4e0] sm:$0xff]
        %v2041 = vld [vmem:[#allocation2 + $0x4e8] sm:$0xff]
        %v2042 = vld [vmem:[#allocation2 + $0x4f0] sm:$0xff]
        %v2043 = vld [vmem:[#allocation2 + $0x4f8] sm:$0xff]
        %v2044 = vld [vmem:[#allocation2 + $0x500] sm:$0xff]
        %v2045 = vld [vmem:[#allocation2 + $0x508] sm:$0xff]
        %v2046 = vld [vmem:[#allocation2 + $0x510] sm:$0xff]
        %v2047 = vld [vmem:[#allocation2 + $0x518] sm:$0xff]
        %v2048 = vld [vmem:[#allocation2 + $0x520] sm:$0xff]
        %v2049 = vld [vmem:[#allocation2 + $0x528] sm:$0xff]
        %v2050 = vld [vmem:[#allocation2 + $0x530] sm:$0xff]
        %v2051 = vld [vmem:[#allocation2 + $0x538] sm:$0xff]
        %v2052 = vld [vmem:[#allocation2 + $0x540] sm:$0xff]
        %v2053 = vld [vmem:[#allocation2 + $0x548] sm:$0xff]
        %v2054 = vld [vmem:[#allocation2 + $0x550] sm:$0xff]
        %v2055 = vld [vmem:[#allocation2 + $0x558] sm:$0xff]
        %v2056 = vld [vmem:[#allocation2 + $0x560] sm:$0xff]
        %v2057 = vld [vmem:[#allocation2 + $0x568] sm:$0xff]
        %v2058 = vld [vmem:[#allocation2 + $0x570] sm:$0xff]
        %v2059 = vld [vmem:[#allocation2 + $0x578] sm:$0xff]
        %v2060 = vld [vmem:[#allocation2 + $0x580] sm:$0xff]
        %v2061 = vld [vmem:[#allocation2 + $0x588] sm:$0xff]
        %v2062 = vld [vmem:[#allocation2 + $0x590] sm:$0xff]
        %v2063 = vld [vmem:[#allocation2 + $0x598] sm:$0xff]
        %v2064 = vld [vmem:[#allocation2 + $0x5a0] sm:$0xff]
        %v2065 = vld [vmem:[#allocation2 + $0x5a8] sm:$0xff]
        %v2066 = vld [vmem:[#allocation2 + $0x5b0] sm:$0xff]
        %v2067 = vld [vmem:[#allocation2 + $0x5b8] sm:$0xff]
        %v2068 = vld [vmem:[#allocation2 + $0x5c0] sm:$0xff]
        %v2069 = vld [vmem:[#allocation2 + $0x5c8] sm:$0xff]
        %v2070 = vld [vmem:[#allocation2 + $0x5d0] sm:$0xff]
        %v2071 = vld [vmem:[#allocation2 + $0x5d8] sm:$0xff]
        %v2072 = vld [vmem:[#allocation2 + $0x5e0] sm:$0xff]
        %v2073 = vld [vmem:[#allocation2 + $0x5e8] sm:$0xff]
        %v2074 = vld [vmem:[#allocation2 + $0x5f0] sm:$0xff]
        %v2075 = vld [vmem:[#allocation2 + $0x5f8] sm:$0xff]
        %v2076 = vld [vmem:[#allocation2 + $0x600] sm:$0xff]
        %v2077 = vld [vmem:[#allocation2 + $0x608] sm:$0xff]
        %v2078 = vld [vmem:[#allocation2 + $0x610] sm:$0xff]
        %v2079 = vld [vmem:[#allocation2 + $0x618] sm:$0xff]
        %v2080 = vld [vmem:[#allocation2 + $0x620] sm:$0xff]
        %v2081 = vld [vmem:[#allocation2 + $0x628] sm:$0xff]
        %v2082 = vld [vmem:[#allocation2 + $0x630] sm:$0xff]
        %v2083 = vld [vmem:[#allocation2 + $0x638] sm:$0xff]
        %v2084 = vld [vmem:[#allocation2 + $0x640] sm:$0xff]
        %v2085 = vld [vmem:[#allocation2 + $0x648] sm:$0xff]
        %v2086 = vld [vmem:[#allocation2 + $0x650] sm:$0xff]
        %v2087 = vld [vmem:[#allocation2 + $0x658] sm:$0xff]
        %v2088 = vld [vmem:[#allocation2 + $0x660] sm:$0xff]
        %v2089 = vld [vmem:[#allocation2 + $0x668] sm:$0xff]
        %v2090 = vld [vmem:[#allocation2 + $0x670] sm:$0xff]
        %v2091 = vld [vmem:[#allocation2 + $0x678] sm:$0xff]
        %v2092 = vld [vmem:[#allocation2 + $0x680] sm:$0xff]
        %v2093 = vld [vmem:[#allocation2 + $0x688] sm:$0xff]
        %v2094 = vld [vmem:[#allocation2 + $0x690] sm:$0xff]
        %v2095 = vld [vmem:[#allocation2 + $0x698] sm:$0xff]
        %v2096 = vld [vmem:[#allocation2 + $0x6a0] sm:$0xff]
        %v2097 = vld [vmem:[#allocation2 + $0x6a8] sm:$0xff]
        %v2098 = vld [vmem:[#allocation2 + $0x6b0] sm:$0xff]
        %v2099 = vld [vmem:[#allocation2 + $0x6b8] sm:$0xff]
        %v2100 = vld [vmem:[#allocation2 + $0x6c0] sm:$0xff]
        %v2101 = vld [vmem:[#allocation2 + $0x6c8] sm:$0xff]
        %v2102 = vld [vmem:[#allocation2 + $0x6d0] sm:$0xff]
        %v2103 = vld [vmem:[#allocation2 + $0x6d8] sm:$0xff]
        %v2104 = vld [vmem:[#allocation2 + $0x6e0] sm:$0xff]
        %v2105 = vld [vmem:[#allocation2 + $0x6e8] sm:$0xff]
        %v2106 = vld [vmem:[#allocation2 + $0x6f0] sm:$0xff]
        %v2107 = vld [vmem:[#allocation2 + $0x6f8] sm:$0xff]
        %v2108 = vld [vmem:[#allocation2 + $0x700] sm:$0xff]
        %v2109 = vld [vmem:[#allocation2 + $0x708] sm:$0xff]
        %v2110 = vld [vmem:[#allocation2 + $0x710] sm:$0xff]
        %v2111 = vld [vmem:[#allocation2 + $0x718] sm:$0xff]
        %v2112 = vld [vmem:[#allocation2 + $0x720] sm:$0xff]
        %v2113 = vld [vmem:[#allocation2 + $0x728] sm:$0xff]
        %v2114 = vld [vmem:[#allocation2 + $0x730] sm:$0xff]
        %v2115 = vld [vmem:[#allocation2 + $0x738] sm:$0xff]
        %v2116 = vld [vmem:[#allocation2 + $0x740] sm:$0xff]
        %v2117 = vld [vmem:[#allocation2 + $0x748] sm:$0xff]
        %v2118 = vld [vmem:[#allocation2 + $0x750] sm:$0xff]
        %v2119 = vld [vmem:[#allocation2 + $0x758] sm:$0xff]
        %v2120 = vld [vmem:[#allocation2 + $0x760] sm:$0xff]
        %v2121 = vld [vmem:[#allocation2 + $0x768] sm:$0xff]
        %v2122 = vld [vmem:[#allocation2 + $0x770] sm:$0xff]
        %v2123 = vld [vmem:[#allocation2 + $0x778] sm:$0xff]
        %v2124 = vld [vmem:[#allocation2 + $0x780] sm:$0xff]
        %v2125 = vld [vmem:[#allocation2 + $0x788] sm:$0xff]
        %v2126 = vld [vmem:[#allocation2 + $0x790] sm:$0xff]
        %v2127 = vld [vmem:[#allocation2 + $0x798] sm:$0xff]
        %v2128 = vld [vmem:[#allocation2 + $0x7a0] sm:$0xff]
        %v2129 = vld [vmem:[#allocation2 + $0x7a8] sm:$0xff]
        %v2130 = vld [vmem:[#allocation2 + $0x7b0] sm:$0xff]
        %v2131 = vld [vmem:[#allocation2 + $0x7b8] sm:$0xff]
        %v2132 = vld [vmem:[#allocation2 + $0x7c0] sm:$0xff]
        %v2133 = vld [vmem:[#allocation2 + $0x7c8] sm:$0xff]
        %v2134 = vld [vmem:[#allocation2 + $0x7d0] sm:$0xff]
        %v2135 = vld [vmem:[#allocation2 + $0x7d8] sm:$0xff]
        %v2136 = vld [vmem:[#allocation2 + $0x7e0] sm:$0xff]
        %v2137 = vld [vmem:[#allocation2 + $0x7e8] sm:$0xff]
        %v2138 = vld [vmem:[#allocation2 + $0x7f0] sm:$0xff]
        %v2139 = vld [vmem:[#allocation2 + $0x7f8] sm:$0xff]
        %2140 = vmatprep.subr.mxu0 %v1915
        %2141 = vmatpush1.msra.mxu0 %v1914
        %2142 = vmatprep.subr.mxu0 %v1913
        %2143 = vmatpush1.msra.mxu0 %v1912
        %2144 = vmatprep.subr.mxu0 %v1911
        %2145 = vmatpush1.msra.mxu0 %v1910
        %2146 = vmatprep.subr.mxu0 %v1909
        %2147 = vmatpush1.msra.mxu0 %v1908
        %2148 = vmatprep.subr.mxu0 %v1907
        %2149 = vmatpush1.msra.mxu0 %v1906
        %2150 = vmatprep.subr.mxu0 %v1905
        %2151 = vmatpush1.msra.mxu0 %v1904
        %2152 = vmatprep.subr.mxu0 %v1903
        %2153 = vmatpush1.msra.mxu0 %v1902
        %2154 = vmatprep.subr.mxu0 %v1901
        %2155 = vmatpush1.msra.mxu0 %v1900
        %2156 = vmatprep.subr.mxu0 %v1899
        %2157 = vmatpush1.msra.mxu0 %v1898
        %2158 = vmatprep.subr.mxu0 %v1897
        %2159 = vmatpush1.msra.mxu0 %v1896
        %2160 = vmatprep.subr.mxu0 %v1895
        %2161 = vmatpush1.msra.mxu0 %v1894
        %2162 = vmatprep.subr.mxu0 %v1893
        %2163 = vmatpush1.msra.mxu0 %v1892
        %2164 = vmatprep.subr.mxu0 %v1891
        %2165 = vmatpush1.msra.mxu0 %v1890
        %2166 = vmatprep.subr.mxu0 %v1889
        %2167 = vmatpush1.msra.mxu0 %v1888
        %2168 = vmatprep.subr.mxu0 %v1887
        %2169 = vmatpush1.msra.mxu0 %v1886
        %2170 = vmatprep.subr.mxu0 %v1885
        %2171 = vmatpush1.msra.mxu0 %v1884
        %2172 = vmatprep.subr.mxu0 %v1947
        %2173 = vmatpush2.msra.mxu0 %v1946
        %2174 = vmatprep.subr.mxu0 %v1945
        %2175 = vmatpush2.msra.mxu0 %v1944
        %2176 = vmatprep.subr.mxu0 %v1943
        %2177 = vmatpush2.msra.mxu0 %v1942
        %2178 = vmatprep.subr.mxu0 %v1941
        %2179 = vmatpush2.msra.mxu0 %v1940
        %2180 = vmatprep.subr.mxu0 %v1939
        %2181 = vmatpush2.msra.mxu0 %v1938
        %2182 = vmatprep.subr.mxu0 %v1937
        %2183 = vmatpush2.msra.mxu0 %v1936
        %2184 = vmatprep.subr.mxu0 %v1935
        %2185 = vmatpush2.msra.mxu0 %v1934
        %2186 = vmatprep.subr.mxu0 %v1933
        %2187 = vmatpush2.msra.mxu0 %v1932
        %2188 = vmatprep.subr.mxu0 %v1931
        %2189 = vmatpush2.msra.mxu0 %v1930
        %2190 = vmatprep.subr.mxu0 %v1929
        %2191 = vmatpush2.msra.mxu0 %v1928
        %2192 = vmatprep.subr.mxu0 %v1927
        %2193 = vmatpush2.msra.mxu0 %v1926
        %2194 = vmatprep.subr.mxu0 %v1925
        %2195 = vmatpush2.msra.mxu0 %v1924
        %2196 = vmatprep.subr.mxu0 %v1923
        %2197 = vmatpush2.msra.mxu0 %v1922
        %2198 = vmatprep.subr.mxu0 %v1921
        %2199 = vmatpush2.msra.mxu0 %v1920
        %2200 = vmatprep.subr.mxu0 %v1919
        %2201 = vmatpush2.msra.mxu0 %v1918
        %2202 = vmatprep.subr.mxu0 %v1917
        %2203 = vmatpush2.msra.mxu0 %v1916
        %2204 = vmatprep.mubr.f32.mxu0 %v1877
        %2205 = vmatmul.mubr.f32.gmra.mxu0 %v1876
        %v2206 = vpop.f32.mrf.mxu0
        %v2207 = vadd.f32 0.0, %v2206
        %v2208 = vpop.f32.mrf.mxu0
        %v2209 = vadd.f32 0.0, %v2208
        %2210 = vdwg.mxu0
        %2211 = vmatprep.subr.mxu0 %v1979
        %2212 = vmatpush1.msra.mxu0 %v1978
        %2213 = vmatprep.subr.mxu0 %v1977
        %2214 = vmatpush1.msra.mxu0 %v1976
        %2215 = vmatprep.subr.mxu0 %v1975
        %2216 = vmatpush1.msra.mxu0 %v1974
        %2217 = vmatprep.subr.mxu0 %v1973
        %2218 = vmatpush1.msra.mxu0 %v1972
        %2219 = vmatprep.subr.mxu0 %v1971
        %2220 = vmatpush1.msra.mxu0 %v1970
        %2221 = vmatprep.subr.mxu0 %v1969
        %2222 = vmatpush1.msra.mxu0 %v1968
        %2223 = vmatprep.subr.mxu0 %v1967
        %2224 = vmatpush1.msra.mxu0 %v1966
        %2225 = vmatprep.subr.mxu0 %v1965
        %2226 = vmatpush1.msra.mxu0 %v1964
        %2227 = vmatprep.subr.mxu0 %v1963
        %2228 = vmatpush1.msra.mxu0 %v1962
        %2229 = vmatprep.subr.mxu0 %v1961
        %2230 = vmatpush1.msra.mxu0 %v1960
        %2231 = vmatprep.subr.mxu0 %v1959
        %2232 = vmatpush1.msra.mxu0 %v1958
        %2233 = vmatprep.subr.mxu0 %v1957
        %2234 = vmatpush1.msra.mxu0 %v1956
        %2235 = vmatprep.subr.mxu0 %v1955
        %2236 = vmatpush1.msra.mxu0 %v1954
        %2237 = vmatprep.subr.mxu0 %v1953
        %2238 = vmatpush1.msra.mxu0 %v1952
        %2239 = vmatprep.subr.mxu0 %v1951
        %2240 = vmatpush1.msra.mxu0 %v1950
        %2241 = vmatprep.subr.mxu0 %v1949
        %2242 = vmatpush1.msra.mxu0 %v1948
        %2243 = vmatprep.subr.mxu0 %v2011
        %2244 = vmatpush2.msra.mxu0 %v2010
        %2245 = vmatprep.subr.mxu0 %v2009
        %2246 = vmatpush2.msra.mxu0 %v2008
        %2247 = vmatprep.subr.mxu0 %v2007
        %2248 = vmatpush2.msra.mxu0 %v2006
        %2249 = vmatprep.subr.mxu0 %v2005
        %2250 = vmatpush2.msra.mxu0 %v2004
        %2251 = vmatprep.subr.mxu0 %v2003
        %2252 = vmatpush2.msra.mxu0 %v2002
        %2253 = vmatprep.subr.mxu0 %v2001
        %2254 = vmatpush2.msra.mxu0 %v2000
        %2255 = vmatprep.subr.mxu0 %v1999
        %2256 = vmatpush2.msra.mxu0 %v1998
        %2257 = vmatprep.subr.mxu0 %v1997
        %2258 = vmatpush2.msra.mxu0 %v1996
        %2259 = vmatprep.subr.mxu0 %v1995
        %2260 = vmatpush2.msra.mxu0 %v1994
        %2261 = vmatprep.subr.mxu0 %v1993
        %2262 = vmatpush2.msra.mxu0 %v1992
        %2263 = vmatprep.subr.mxu0 %v1991
        %2264 = vmatpush2.msra.mxu0 %v1990
        %2265 = vmatprep.subr.mxu0 %v1989
        %2266 = vmatpush2.msra.mxu0 %v1988
        %2267 = vmatprep.subr.mxu0 %v1987
        %2268 = vmatpush2.msra.mxu0 %v1986
        %2269 = vmatprep.subr.mxu0 %v1985
        %2270 = vmatpush2.msra.mxu0 %v1984
        %2271 = vmatprep.subr.mxu0 %v1983
        %2272 = vmatpush2.msra.mxu0 %v1982
        %2273 = vmatprep.subr.mxu0 %v1981
        %2274 = vmatpush2.msra.mxu0 %v1980
        %2275 = vmatprep.mubr.f32.mxu0 %v1879
        %2276 = vmatmul.mubr.f32.gmra.mxu0 %v1878
        %v2277 = vpop.f32.mrf.mxu0
        %v2278 = vadd.f32 %v2207, %v2277
        %v2279 = vpop.f32.mrf.mxu0
        %v2280 = vadd.f32 %v2209, %v2279
        %2281 = vdwg.mxu0
        %2282 = vmatprep.subr.mxu0 %v2043
        %2283 = vmatpush1.msra.mxu0 %v2042
        %2284 = vmatprep.subr.mxu0 %v2041
        %2285 = vmatpush1.msra.mxu0 %v2040
        %2286 = vmatprep.subr.mxu0 %v2039
        %2287 = vmatpush1.msra.mxu0 %v2038
        %2288 = vmatprep.subr.mxu0 %v2037
        %2289 = vmatpush1.msra.mxu0 %v2036
        %2290 = vmatprep.subr.mxu0 %v2035
        %2291 = vmatpush1.msra.mxu0 %v2034
        %2292 = vmatprep.subr.mxu0 %v2033
        %2293 = vmatpush1.msra.mxu0 %v2032
        %2294 = vmatprep.subr.mxu0 %v2031
        %2295 = vmatpush1.msra.mxu0 %v2030
        %2296 = vmatprep.subr.mxu0 %v2029
        %2297 = vmatpush1.msra.mxu0 %v2028
        %2298 = vmatprep.subr.mxu0 %v2027
        %2299 = vmatpush1.msra.mxu0 %v2026
        %2300 = vmatprep.subr.mxu0 %v2025
        %2301 = vmatpush1.msra.mxu0 %v2024
        %2302 = vmatprep.subr.mxu0 %v2023
        %2303 = vmatpush1.msra.mxu0 %v2022
        %2304 = vmatprep.subr.mxu0 %v2021
        %2305 = vmatpush1.msra.mxu0 %v2020
        %2306 = vmatprep.subr.mxu0 %v2019
        %2307 = vmatpush1.msra.mxu0 %v2018
        %2308 = vmatprep.subr.mxu0 %v2017
        %2309 = vmatpush1.msra.mxu0 %v2016
        %2310 = vmatprep.subr.mxu0 %v2015
        %2311 = vmatpush1.msra.mxu0 %v2014
        %2312 = vmatprep.subr.mxu0 %v2013
        %2313 = vmatpush1.msra.mxu0 %v2012
        %2314 = vmatprep.subr.mxu0 %v2075
        %2315 = vmatpush2.msra.mxu0 %v2074
        %2316 = vmatprep.subr.mxu0 %v2073
        %2317 = vmatpush2.msra.mxu0 %v2072
        %2318 = vmatprep.subr.mxu0 %v2071
        %2319 = vmatpush2.msra.mxu0 %v2070
        %2320 = vmatprep.subr.mxu0 %v2069
        %2321 = vmatpush2.msra.mxu0 %v2068
        %2322 = vmatprep.subr.mxu0 %v2067
        %2323 = vmatpush2.msra.mxu0 %v2066
        %2324 = vmatprep.subr.mxu0 %v2065
        %2325 = vmatpush2.msra.mxu0 %v2064
        %2326 = vmatprep.subr.mxu0 %v2063
        %2327 = vmatpush2.msra.mxu0 %v2062
        %2328 = vmatprep.subr.mxu0 %v2061
        %2329 = vmatpush2.msra.mxu0 %v2060
        %2330 = vmatprep.subr.mxu0 %v2059
        %2331 = vmatpush2.msra.mxu0 %v2058
        %2332 = vmatprep.subr.mxu0 %v2057
        %2333 = vmatpush2.msra.mxu0 %v2056
        %2334 = vmatprep.subr.mxu0 %v2055
        %2335 = vmatpush2.msra.mxu0 %v2054
        %2336 = vmatprep.subr.mxu0 %v2053
        %2337 = vmatpush2.msra.mxu0 %v2052
        %2338 = vmatprep.subr.mxu0 %v2051
        %2339 = vmatpush2.msra.mxu0 %v2050
        %2340 = vmatprep.subr.mxu0 %v2049
        %2341 = vmatpush2.msra.mxu0 %v2048
        %2342 = vmatprep.subr.mxu0 %v2047
        %2343 = vmatpush2.msra.mxu0 %v2046
        %2344 = vmatprep.subr.mxu0 %v2045
        %2345 = vmatpush2.msra.mxu0 %v2044
        %2346 = vmatprep.mubr.f32.mxu0 %v1881
        %2347 = vmatmul.mubr.f32.gmra.mxu0 %v1880
        %v2348 = vpop.f32.mrf.mxu0
        %v2349 = vadd.f32 %v2278, %v2348
        %v2350 = vpop.f32.mrf.mxu0
        %v2351 = vadd.f32 %v2280, %v2350
        %2352 = vdwg.mxu0
        %2353 = vmatprep.subr.mxu0 %v2107
        %2354 = vmatpush1.msra.mxu0 %v2106
        %2355 = vmatprep.subr.mxu0 %v2105
        %2356 = vmatpush1.msra.mxu0 %v2104
        %2357 = vmatprep.subr.mxu0 %v2103
        %2358 = vmatpush1.msra.mxu0 %v2102
        %2359 = vmatprep.subr.mxu0 %v2101
        %2360 = vmatpush1.msra.mxu0 %v2100
        %2361 = vmatprep.subr.mxu0 %v2099
        %2362 = vmatpush1.msra.mxu0 %v2098
        %2363 = vmatprep.subr.mxu0 %v2097
        %2364 = vmatpush1.msra.mxu0 %v2096
        %2365 = vmatprep.subr.mxu0 %v2095
        %2366 = vmatpush1.msra.mxu0 %v2094
        %2367 = vmatprep.subr.mxu0 %v2093
        %2368 = vmatpush1.msra.mxu0 %v2092
        %2369 = vmatprep.subr.mxu0 %v2091
        %2370 = vmatpush1.msra.mxu0 %v2090
        %2371 = vmatprep.subr.mxu0 %v2089
        %2372 = vmatpush1.msra.mxu0 %v2088
        %2373 = vmatprep.subr.mxu0 %v2087
        %2374 = vmatpush1.msra.mxu0 %v2086
        %2375 = vmatprep.subr.mxu0 %v2085
        %2376 = vmatpush1.msra.mxu0 %v2084
        %2377 = vmatprep.subr.mxu0 %v2083
        %2378 = vmatpush1.msra.mxu0 %v2082
        %2379 = vmatprep.subr.mxu0 %v2081
        %2380 = vmatpush1.msra.mxu0 %v2080
        %2381 = vmatprep.subr.mxu0 %v2079
        %2382 = vmatpush1.msra.mxu0 %v2078
        %2383 = vmatprep.subr.mxu0 %v2077
        %2384 = vmatpush1.msra.mxu0 %v2076
        %2385 = vmatprep.subr.mxu0 %v2139
        %2386 = vmatpush2.msra.mxu0 %v2138
        %2387 = vmatprep.subr.mxu0 %v2137
        %2388 = vmatpush2.msra.mxu0 %v2136
        %2389 = vmatprep.subr.mxu0 %v2135
        %2390 = vmatpush2.msra.mxu0 %v2134
        %2391 = vmatprep.subr.mxu0 %v2133
        %2392 = vmatpush2.msra.mxu0 %v2132
        %2393 = vmatprep.subr.mxu0 %v2131
        %2394 = vmatpush2.msra.mxu0 %v2130
        %2395 = vmatprep.subr.mxu0 %v2129
        %2396 = vmatpush2.msra.mxu0 %v2128
        %2397 = vmatprep.subr.mxu0 %v2127
        %2398 = vmatpush2.msra.mxu0 %v2126
        %2399 = vmatprep.subr.mxu0 %v2125
        %2400 = vmatpush2.msra.mxu0 %v2124
        %2401 = vmatprep.subr.mxu0 %v2123
        %2402 = vmatpush2.msra.mxu0 %v2122
        %2403 = vmatprep.subr.mxu0 %v2121
        %2404 = vmatpush2.msra.mxu0 %v2120
        %2405 = vmatprep.subr.mxu0 %v2119
        %2406 = vmatpush2.msra.mxu0 %v2118
        %2407 = vmatprep.subr.mxu0 %v2117
        %2408 = vmatpush2.msra.mxu0 %v2116
        %2409 = vmatprep.subr.mxu0 %v2115
        %2410 = vmatpush2.msra.mxu0 %v2114
        %2411 = vmatprep.subr.mxu0 %v2113
        %2412 = vmatpush2.msra.mxu0 %v2112
        %2413 = vmatprep.subr.mxu0 %v2111
        %2414 = vmatpush2.msra.mxu0 %v2110
        %2415 = vmatprep.subr.mxu0 %v2109
        %2416 = vmatpush2.msra.mxu0 %v2108
        %2417 = vmatprep.mubr.f32.mxu0 %v1883
        %2418 = vmatmul.mubr.f32.gmra.mxu0 %v1882
        %v2419 = vpop.f32.mrf.mxu0
        %v2420 = vadd.f32 %v2349, %v2419
        %v2421 = vpop.f32.mrf.mxu0
        %v2422 = vadd.f32 %v2351, %v2421
        %2423 = vdwg.mxu0
        %2424 = vst [vmem:[%s298] sm:$0xff] %v2420
        %2425 = vst [vmem:[%s298 + $0x8] sm:$0xff] %v2422
        %p2426 = scmp.lt.s32.totalorder %s19, 1
        %s2427 = scalar_select %p2426, %s19, 1
        %s2428 = smul.addr %s2427, 2
        %s2429 = smul.addr %s2428, 8
        %s2430 = scalar_lea.vmem %s7, %s2429
        // Predicated region
        $region53: #{conv_block_forward.1} parent=47 // pred_check
          %p2431 = pneg %p189
        $region54: #{conv_block_forward.1} parent=47 // pred_check_branch
          %2433 = sbr.rel (%p2431) target = $region56
        $region55: #{conv_block_forward.1} parent=47 // pred_region
          _
        $region56: #{conv_block_forward.1} parent=47 // pred_fallthru
          _
      $region48: #{conv_block_forward.1} parent=5 // pred_fallthru
        _
      %p2434 = scmp.le.s32.totalorder 2, %s14
      // Predicated region
      $region57: #{conv_block_forward.1} parent=5 // pred_check
        %p2435 = pneg %p2434
      $region58: #{conv_block_forward.1} parent=5 // pred_check_branch
        %2437 = sbr.rel (%p2435) target = $region60
      $region59: #{conv_block_forward.1} parent=5 // pred_region
        %s2438 = ssub.s32 %s14, 2
        // Predicated region
        $region61: #{conv_block_forward.1} parent=59 // pred_check
          %p2439 = pneg %p195
        $region62: #{conv_block_forward.1} parent=59 // pred_check_branch
          %2441 = sbr.rel (%p2439) target = $region64
        $region63: #{conv_block_forward.1} parent=59 // pred_region
          %p2442 = scmp.lt.s32.totalorder %s20, 1
          %s2443 = scalar_select %p2442, %s20, 1
          %s2444 = smul.addr %s2443, 2
          %s2445 = smul.addr %s2444, 8
          %s2446 = scalar_lea.vmem %s7, %s2445
        $region64: #{conv_block_forward.1} parent=59 // pred_fallthru
          _
      $region60: #{conv_block_forward.1} parent=5 // pred_fallthru
        _
    $region6: #{conv_block_forward.1} parent=1 // loop_footer
      %s18 = sadd.s32 1, %s14
    $region7: #{conv_block_forward.1} parent=1 // loop_footer_branch
      %13 = sbr.rel target = $region3
    $region8: #{conv_block_forward.1} parent=1 // loop_exit
      _
    %2447 = vsyncpa [#allocation3], 1
    %s2448 = scalar_lea.sflag [#allocation3], 1
    %2449 = vsyncpa %s2448, 1

</llo_original>
